<compile_context>
chip_gen: v7x
topology: tpu7x:2x2x1
jax: 0.10.0
libtpu: 0.0.40
codegen_flags: <defaults>
</compile_context>

<pallas_src>
import functools

import jax
import jax.numpy as jnp
from jax.experimental import pallas as pl
from jax.experimental.pallas import tpu as pltpu


# ----------------------------------------------------------------------------
# Pallas kernel: fused  y = GELU(x @ W1 + b1) @ W2 + b2   (bf16 in, f32 acc)
# ----------------------------------------------------------------------------
def _mlp_kernel(x_ref, w1_ref, b1_ref, w2_ref, b2_ref, o_ref):
    # bf16 x / W1 straight into the MXU, accumulate in f32.
    h = jnp.dot(x_ref[...], w1_ref[...], preferred_element_type=jnp.float32)
    h = h + b1_ref[...]                       # f32 bias broadcast over batch tile
    # tanh-GELU: transcendental goes to the EUP slot (own VLIW slot) instead of
    # the VALU-bound exact-erf polynomial.
    h = jax.nn.gelu(h, approximate=True)
    # cast back to bf16 for the second MXU pass; keep f32 accumulation.
    y = jnp.dot(h.astype(w2_ref.dtype), w2_ref[...],
                preferred_element_type=jnp.float32)
    y = y + b2_ref[...]
    o_ref[...] = y.astype(o_ref.dtype)


@functools.partial(jax.jit, static_argnames=("block_m",))
def _mlp_pallas(x, w1, b1, w2, b2, *, block_m=128):
    batch, d_in = x.shape
    d_hidden = w1.shape[1]
    d_out = w2.shape[1]

    # Batch tile: block_m rows if it divides the batch, otherwise fall back to
    # one full-batch tile (block == full array dim is always legal).
    tm = min(block_m, batch)
    if batch % tm != 0:
        tm = batch
    grid = (batch // tm,)

    flops = 2 * batch * (d_in * d_hidden + d_hidden * d_out)
    bytes_accessed = (
        x.size * x.dtype.itemsize
        + w1.size * w1.dtype.itemsize
        + b1.size * b1.dtype.itemsize
        + w2.size * w2.dtype.itemsize
        + b2.size * b2.dtype.itemsize
        + batch * d_out * x.dtype.itemsize
    )

    return pl.pallas_call(
        _mlp_kernel,
        out_shape=jax.ShapeDtypeStruct((batch, d_out), x.dtype),
        grid=grid,
        in_specs=[
            # activations: tiled over batch (double-buffered, pipelined DMA)
            pl.BlockSpec((tm, d_in), lambda i: (i, 0)),
            # weights / biases: same block every step -> resident in VMEM;
            # single-buffered (the default 2nd buffer would be pure waste).
            pl.BlockSpec((d_in, d_hidden), lambda i: (0, 0),
                         pipeline_mode=pl.Buffered(1)),
            pl.BlockSpec((1, d_hidden), lambda i: (0, 0),
                         pipeline_mode=pl.Buffered(1)),
            pl.BlockSpec((d_hidden, d_out), lambda i: (0, 0),
                         pipeline_mode=pl.Buffered(1)),
            pl.BlockSpec((1, d_out), lambda i: (0, 0),
                         pipeline_mode=pl.Buffered(1)),
        ],
        out_specs=pl.BlockSpec((tm, d_out), lambda i: (i, 0)),
        compiler_params=pltpu.CompilerParams(
            # batch tiles are independent -> shard across v7x's 2 TCs
            dimension_semantics=("parallel",),
            # actual footprint ~1 MiB; leave generous headroom, not all of VMEM
            vmem_limit_bytes=16 * 1024 * 1024,
        ),
        cost_estimate=pl.CostEstimate(
            flops=flops,
            transcendentals=batch * d_hidden,   # one tanh per hidden activation
            bytes_accessed=bytes_accessed,
        ),
    )(x, w1, b1, w2, b2)


# ----------------------------------------------------------------------------
# Inner "model" (the thing ModelWrapper wraps) and the wrapper itself
# ----------------------------------------------------------------------------
class InnerMLP:
    """Deterministic 2-layer MLP; forward signature: model(x=...)."""

    def __init__(self, d_in, d_hidden, d_out, key):
        k1, k2 = jax.random.split(key)
        # bf16 weights (MXU-native), f32 biases (added to the f32 accumulator)
        self.w1 = (jax.random.normal(k1, (d_in, d_hidden), jnp.float32)
                   * 0.05).astype(jnp.bfloat16)
        self.b1 = jnp.zeros((1, d_hidden), jnp.float32)
        self.w2 = (jax.random.normal(k2, (d_hidden, d_out), jnp.float32)
                   * 0.05).astype(jnp.bfloat16)
        self.b2 = jnp.zeros((1, d_out), jnp.float32)

    def __call__(self, x):
        return _mlp_pallas(x, self.w1, self.b1, self.w2, self.b2, block_m=128)


class ModelWrapper:
    """JAX analogue of the PyTorch ModelWrapper: forward(inputs) -> model(**inputs)."""

    def __init__(self, model):
        self.model = model

    def __call__(self, inputs):
        return self.model(**inputs)


# ----------------------------------------------------------------------------
if __name__ == "__main__":
    key = jax.random.PRNGKey(0)
    k_param, k_data = jax.random.split(key)

    # lane-dense sizes: feature dims multiples of 128 (output = 256 -> unmasked
    # vst); batch = 4 x TM so v7x gets 2 pipelined steps per TensorCore.
    batch, d_in, d_hidden, d_out = 512, 256, 512, 256
    model = InnerMLP(d_in, d_hidden, d_out, k_param)
    wrapper = ModelWrapper(model)

    x = jax.random.normal(k_data, (batch, d_in), jnp.float32).astype(jnp.bfloat16)
    inputs = {"x": x}  # ModelWrapper forwards kwargs, just like model(**inputs)

    out = wrapper(inputs)
    out = jax.block_until_ready(out)

    # pure-JAX reference of the same inner model (same bf16-in / f32-acc math,
    # same tanh-GELU as the kernel)
    h_ref = jnp.dot(x, model.w1, preferred_element_type=jnp.float32) + model.b1
    h_ref = jax.nn.gelu(h_ref, approximate=True)
    y_ref = (jnp.dot(h_ref.astype(jnp.bfloat16), model.w2,
                     preferred_element_type=jnp.float32) + model.b2)
    ref = y_ref.astype(jnp.bfloat16)

    assert out.shape == (batch, d_out)
    assert out.dtype == jnp.bfloat16
    assert jnp.allclose(out.astype(jnp.float32), ref.astype(jnp.float32),
                        atol=1e-2, rtol=1e-2)

    print("KERNEL_OK")
</pallas_src>

<mosaic_0001>
module attributes {stable_mosaic.version = 11 : i64} {
  func.func @_mlp_kernel(%arg0: i32, %arg1: memref<128x256xbf16, #tpu.memory_space<vmem>>, %arg2: memref<256x512xbf16, #tpu.memory_space<vmem>>, %arg3: memref<1x512xf32, #tpu.memory_space<vmem>>, %arg4: memref<512x256xbf16, #tpu.memory_space<vmem>>, %arg5: memref<1x256xf32, #tpu.memory_space<vmem>>, %arg6: memref<128x256xbf16, #tpu.memory_space<vmem>>) attributes {dimension_semantics = [#tpu.dimension_semantics<parallel>], iteration_bounds = array<i64: 4>, scalar_prefetch = 0 : i64, scratch_operands = 0 : i64, tpu.core_type = #tpu.core_type<tc>, window_params = [{transform_indices = @transform_0, window_bounds = array<i64: 128, 256>}, {pipeline_mode = #tpu.pipeline_mode<synchronous>, transform_indices = @transform_1, window_bounds = array<i64: 256, 512>}, {pipeline_mode = #tpu.pipeline_mode<synchronous>, transform_indices = @transform_2, window_bounds = array<i64: 1, 512>}, {pipeline_mode = #tpu.pipeline_mode<synchronous>, transform_indices = @transform_3, window_bounds = array<i64: 512, 256>}, {pipeline_mode = #tpu.pipeline_mode<synchronous>, transform_indices = @transform_4, window_bounds = array<i64: 1, 256>}, {transform_indices = @transform_5, window_bounds = array<i64: 128, 256>}]} {
    %c0 = arith.constant 0 : index
    %c0_0 = arith.constant 0 : index
    %0 = vector.load %arg1[%c0, %c0_0] : memref<128x256xbf16, #tpu.memory_space<vmem>>, vector<128x256xbf16>
    %c0_1 = arith.constant 0 : index
    %c0_2 = arith.constant 0 : index
    %1 = vector.load %arg2[%c0_1, %c0_2] : memref<256x512xbf16, #tpu.memory_space<vmem>>, vector<256x512xbf16>
    %cst = arith.constant dense<0.000000e+00> : vector<128x512xf32>
    %2 = tpu.matmul %0, %1, %cst {dimension_numbers = #tpu.dot_dimension_numbers<[1], [0], [0], [1], [0, 0, 1, 1], [], []>} : vector<128x256xbf16>, vector<256x512xbf16>, vector<128x512xf32> -> vector<128x512xf32>
    %c0_3 = arith.constant 0 : index
    %c0_4 = arith.constant 0 : index
    %3 = vector.load %arg3[%c0_3, %c0_4] : memref<1x512xf32, #tpu.memory_space<vmem>>, vector<1x512xf32>
    %4 = vector.broadcast %3 : vector<1x512xf32> to vector<128x512xf32>
    %5 = arith.addf %2, %4 : vector<128x512xf32>
    %6 = arith.mulf %5, %5 : vector<128x512xf32>
    %7 = arith.mulf %5, %6 : vector<128x512xf32>
    %cst_5 = arith.constant 4.471500e-02 : f32
    %8 = vector.broadcast %cst_5 : f32 to vector<128x512xf32>
    %9 = arith.mulf %8, %7 : vector<128x512xf32>
    %10 = arith.addf %5, %9 : vector<128x512xf32>
    %cst_6 = arith.constant 0.797884583 : f32
    %11 = vector.broadcast %cst_6 : f32 to vector<128x512xf32>
    %12 = arith.mulf %11, %10 : vector<128x512xf32>
    %13 = math.tanh %12 : vector<128x512xf32>
    %cst_7 = arith.constant 1.000000e+00 : f32
    %14 = vector.broadcast %cst_7 : f32 to vector<128x512xf32>
    %15 = arith.addf %14, %13 : vector<128x512xf32>
    %cst_8 = arith.constant 5.000000e-01 : f32
    %16 = vector.broadcast %cst_8 : f32 to vector<128x512xf32>
    %17 = arith.mulf %16, %15 : vector<128x512xf32>
    %18 = arith.mulf %5, %17 : vector<128x512xf32>
    %19 = arith.truncf %18 : vector<128x512xf32> to vector<128x512xbf16>
    %c0_9 = arith.constant 0 : index
    %c0_10 = arith.constant 0 : index
    %20 = vector.load %arg4[%c0_9, %c0_10] : memref<512x256xbf16, #tpu.memory_space<vmem>>, vector<512x256xbf16>
    %cst_11 = arith.constant dense<0.000000e+00> : vector<128x256xf32>
    %21 = tpu.matmul %19, %20, %cst_11 {dimension_numbers = #tpu.dot_dimension_numbers<[1], [0], [0], [1], [0, 0, 1, 1], [], []>} : vector<128x512xbf16>, vector<512x256xbf16>, vector<128x256xf32> -> vector<128x256xf32>
    %c0_12 = arith.constant 0 : index
    %c0_13 = arith.constant 0 : index
    %22 = vector.load %arg5[%c0_12, %c0_13] : memref<1x256xf32, #tpu.memory_space<vmem>>, vector<1x256xf32>
    %23 = vector.broadcast %22 : vector<1x256xf32> to vector<128x256xf32>
    %24 = arith.addf %21, %23 : vector<128x256xf32>
    %25 = arith.truncf %24 : vector<128x256xf32> to vector<128x256xbf16>
    %c0_14 = arith.constant 0 : index
    %c0_15 = arith.constant 0 : index
    %26 = vector.load %arg6[%c0_14, %c0_15] : memref<128x256xbf16, #tpu.memory_space<vmem>>, vector<128x256xbf16>
    tpu.vector_store %arg6[%c0_14, %c0_15], %25 {strides = array<i32>} : memref<128x256xbf16, #tpu.memory_space<vmem>>, vector<128x256xbf16>,
    return
  }
  func.func @transform_0(%arg0: i32) -> (i32, i32) {
    %c0_i32 = arith.constant 0 : i32
    %c0_i32_0 = arith.constant 0 : i32
    return %arg0, %c0_i32 : i32, i32
  }
  func.func @transform_1(%arg0: i32) -> (i32, i32) {
    %c0_i32 = arith.constant 0 : i32
    %c0_i32_0 = arith.constant 0 : i32
    %c0_i32_1 = arith.constant 0 : i32
    return %c0_i32, %c0_i32_0 : i32, i32
  }
  func.func @transform_2(%arg0: i32) -> (i32, i32) {
    %c0_i32 = arith.constant 0 : i32
    %c0_i32_0 = arith.constant 0 : i32
    %c0_i32_1 = arith.constant 0 : i32
    return %c0_i32, %c0_i32_0 : i32, i32
  }
  func.func @transform_3(%arg0: i32) -> (i32, i32) {
    %c0_i32 = arith.constant 0 : i32
    %c0_i32_0 = arith.constant 0 : i32
    %c0_i32_1 = arith.constant 0 : i32
    return %c0_i32, %c0_i32_0 : i32, i32
  }
  func.func @transform_4(%arg0: i32) -> (i32, i32) {
    %c0_i32 = arith.constant 0 : i32
    %c0_i32_0 = arith.constant 0 : i32
    %c0_i32_1 = arith.constant 0 : i32
    return %c0_i32, %c0_i32_0 : i32, i32
  }
  func.func @transform_5(%arg0: i32) -> (i32, i32) {
    %c0_i32 = arith.constant 0 : i32
    %c0_i32_0 = arith.constant 0 : i32
    return %arg0, %c0_i32 : i32, i32
  }
}

</mosaic_0001>

<llo_original>
// kernel: _mlp_pallas.1
$region0: #{_mlp_pallas.1}
  #allocation0 [shape = 'u32[]', space=smem, size = 0x4, offset = 0x4, fixed_abs, tag = 'smem constant byte address 0x4 - core index']
  #allocation1 [shape = 'u32[144,128]{1,0:T(1,128)}', space=vmem, size = 0x12000, scoped, tag = 'internal scratch']
  %s0 = inlined_call_operand.hbm [shape: bf16[512,256], index: 0, kind: input, shape index: {}]
  %s1 = inlined_call_operand.hbm [shape: bf16[256,512], index: 1, kind: input, shape index: {}]
  %s2 = inlined_call_operand.vmem [shape: f32[1,512], index: 2, kind: input, shape index: {}]
  %s3 = inlined_call_operand.hbm [shape: bf16[512,256], index: 3, kind: input, shape index: {}]
  %s4 = inlined_call_operand.vmem [shape: f32[1,256], index: 4, kind: input, shape index: {}]
  %s5 = inlined_call_operand.hbm [shape: bf16[512,256], index: 5, kind: output, shape index: {}]
  %s6 = sld [smem:[#allocation0]]
  $region65: #{_mlp_pallas.1} parent=0
    _
  %s8 = ssub.s32 1, %s6
  %s9 = scalar_select 0, %s8, %s6
  $region1: #{_mlp_pallas.1} parent=0
    #allocation2 [shape = 'u8[131072]{0}', space=vmem, size = 0x20000, scoped, tag = 'input window, operand 0']
    #allocation3 [shape = 's32[2]{0}', space=sflag, size = 0x8, scoped, tag = 'scoped memory for _mlp_pallas.1']
    #allocation4 [shape = 's32[2]{0}', space=sflag, size = 0x8, scoped, tag = 'scoped memory for _mlp_pallas.1']
    #allocation5 [shape = 'u8[262144]{0}', space=vmem, size = 0x40000, scoped, tag = 'input window, operand 1, single buffered']
    #allocation6 [shape = 's32[1]{0}', space=sflag, size = 0x4, scoped, tag = 'scoped memory for _mlp_pallas.1']
    #allocation7 [shape = 'u8[262144]{0}', space=vmem, size = 0x40000, scoped, tag = 'input window, operand 3, single buffered']
    #allocation8 [shape = 'u8[131072]{0}', space=vmem, size = 0x20000, scoped, tag = 'output window, operand 0']
    %10 = vsyncpa [#allocation3], 0
    %s11 = scalar_lea.sflag [#allocation3], 1
    %12 = vsyncpa %s11, 0
    %13 = vsyncpa [#allocation6], 0
    %14 = vsyncpa [#allocation4], 0
    %s15 = scalar_lea.sflag [#allocation4], 1
    %16 = vsyncpa %s15, 0
    loop: start=0, step=1, limit=6
    $region2: #{_mlp_pallas.1} parent=1 // loop_pre_header
      _
    $region3: #{_mlp_pallas.1} parent=1 // loop_header
      %s18 = sphi 0, %s22
      %p19 = scmp.ge.s32.totalorder %s18, 6
      %s28 = sphi 0, %s30
      %s31 = sphi 0, %s28
      %s32 = sphi 0, %s31
      %s48 = sphi 0, %s32
      %s52 = sphi 0, %s52
      %s54 = sphi 0, %s52
      %s55 = sphi 0, %s54
      %s69 = sphi 0, %s55
      %s73 = sphi 0, %s73
      %s75 = sphi 0, %s73
      %s76 = sphi 0, %s75
      %s90 = sphi 0, %s76
      %s94 = sphi 0, %s94
      %s96 = sphi 0, %s94
      %s97 = sphi 0, %s96
      %s111 = sphi 0, %s97
      %s115 = sphi 0, %s115
      %s117 = sphi 0, %s115
      %s118 = sphi 0, %s117
      %s132 = sphi 0, %s118
      %s138 = sphi 0, %s140
      %s141 = sphi 0, %s138
      %s142 = sphi 0, %s141
      %s158 = sphi 0, %s142
    $region4: #{_mlp_pallas.1} parent=1 // loop_header_branch
      %21 = sbr.rel (%p19) target = $region8
    $region5: #{_mlp_pallas.1} parent=1 // loop_body
      %s23 = ssub.s32 %s18, 1
      %s24 = ssub.s32 %s18, 2
      %s25 = sadd.s32 %s18, 1
      %s26 = ssub.s32 %s18, %s25
      %p27 = scmp.eq.s32.totalorder %s26, 0
      %s29 = sadd.s32 %s28, 1
      %s30 = scalar_select %p27, %s28, %s29
      %p33 = pneg %p27
      %p34 = scmp.eq.s32.totalorder %s18, 3
      %p35 = por %p33, %p34
      %p36 = scmp.ne.s32.totalorder %s28, %s31
      %p37 = scmp.eq.s32.totalorder %s18, 0
      %p38 = por %p36, %p37
      %p39 = scmp.ne.s32.totalorder %s28, %s31
      %p40 = scmp.eq.s32.totalorder %s23, 3
      %p41 = por %p39, %p40
      %p42 = scmp.ne.s32.totalorder %s31, %s32
      %p43 = scmp.eq.s32.totalorder %s23, 0
      %p44 = por %p42, %p43
      %p45 = scmp.ne.s32.totalorder %s31, %s32
      %p46 = scmp.eq.s32.totalorder %s24, 3
      %p47 = por %p45, %p46
      %p49 = scmp.ne.s32.totalorder %s32, %s48
      %p50 = scmp.eq.s32.totalorder %s24, 0
      %p51 = por %p49, %p50
      %s53 = sadd.s32 %s52, 1
      %p56 = scmp.eq.s32.totalorder %s18, 3
      %p57 = scmp.ne.s32.totalorder %s52, %s54
      %p58 = scmp.eq.s32.totalorder %s18, 0
      %p59 = por %p57, %p58
      %p60 = scmp.ne.s32.totalorder %s52, %s54
      %p61 = scmp.eq.s32.totalorder %s23, 3
      %p62 = por %p60, %p61
      %p63 = scmp.ne.s32.totalorder %s54, %s55
      %p64 = scmp.eq.s32.totalorder %s23, 0
      %p65 = por %p63, %p64
      %p66 = scmp.ne.s32.totalorder %s54, %s55
      %p67 = scmp.eq.s32.totalorder %s24, 3
      %p68 = por %p66, %p67
      %p70 = scmp.ne.s32.totalorder %s55, %s69
      %p71 = scmp.eq.s32.totalorder %s24, 0
      %p72 = por %p70, %p71
      %s74 = sadd.s32 %s73, 1
      %p77 = scmp.eq.s32.totalorder %s18, 3
      %p78 = scmp.ne.s32.totalorder %s73, %s75
      %p79 = scmp.eq.s32.totalorder %s18, 0
      %p80 = por %p78, %p79
      %p81 = scmp.ne.s32.totalorder %s73, %s75
      %p82 = scmp.eq.s32.totalorder %s23, 3
      %p83 = por %p81, %p82
      %p84 = scmp.ne.s32.totalorder %s75, %s76
      %p85 = scmp.eq.s32.totalorder %s23, 0
      %p86 = por %p84, %p85
      %p87 = scmp.ne.s32.totalorder %s75, %s76
      %p88 = scmp.eq.s32.totalorder %s24, 3
      %p89 = por %p87, %p88
      %p91 = scmp.ne.s32.totalorder %s76, %s90
      %p92 = scmp.eq.s32.totalorder %s24, 0
      %p93 = por %p91, %p92
      %s95 = sadd.s32 %s94, 1
      %p98 = scmp.eq.s32.totalorder %s18, 3
      %p99 = scmp.ne.s32.totalorder %s94, %s96
      %p100 = scmp.eq.s32.totalorder %s18, 0
      %p101 = por %p99, %p100
      %p102 = scmp.ne.s32.totalorder %s94, %s96
      %p103 = scmp.eq.s32.totalorder %s23, 3
      %p104 = por %p102, %p103
      %p105 = scmp.ne.s32.totalorder %s96, %s97
      %p106 = scmp.eq.s32.totalorder %s23, 0
      %p107 = por %p105, %p106
      %p108 = scmp.ne.s32.totalorder %s96, %s97
      %p109 = scmp.eq.s32.totalorder %s24, 3
      %p110 = por %p108, %p109
      %p112 = scmp.ne.s32.totalorder %s97, %s111
      %p113 = scmp.eq.s32.totalorder %s24, 0
      %p114 = por %p112, %p113
      %s116 = sadd.s32 %s115, 1
      %p119 = scmp.eq.s32.totalorder %s18, 3
      %p120 = scmp.ne.s32.totalorder %s115, %s117
      %p121 = scmp.eq.s32.totalorder %s18, 0
      %p122 = por %p120, %p121
      %p123 = scmp.ne.s32.totalorder %s115, %s117
      %p124 = scmp.eq.s32.totalorder %s23, 3
      %p125 = por %p123, %p124
      %p126 = scmp.ne.s32.totalorder %s117, %s118
      %p127 = scmp.eq.s32.totalorder %s23, 0
      %p128 = por %p126, %p127
      %p129 = scmp.ne.s32.totalorder %s117, %s118
      %p130 = scmp.eq.s32.totalorder %s24, 3
      %p131 = por %p129, %p130
      %p133 = scmp.ne.s32.totalorder %s118, %s132
      %p134 = scmp.eq.s32.totalorder %s24, 0
      %p135 = por %p133, %p134
      %s136 = ssub.s32 %s18, %s25
      %p137 = scmp.eq.s32.totalorder %s136, 0
      %s139 = sadd.s32 %s138, 1
      %s140 = scalar_select %p137, %s138, %s139
      %p143 = pneg %p137
      %p144 = scmp.eq.s32.totalorder %s18, 3
      %p145 = por %p143, %p144
      %p146 = scmp.ne.s32.totalorder %s138, %s141
      %p147 = scmp.eq.s32.totalorder %s18, 0
      %p148 = por %p146, %p147
      %p149 = scmp.ne.s32.totalorder %s138, %s141
      %p150 = scmp.eq.s32.totalorder %s23, 3
      %p151 = por %p149, %p150
      %p152 = scmp.ne.s32.totalorder %s141, %s142
      %p153 = scmp.eq.s32.totalorder %s23, 0
      %p154 = por %p152, %p153
      %p155 = scmp.ne.s32.totalorder %s141, %s142
      %p156 = scmp.eq.s32.totalorder %s24, 3
      %p157 = por %p155, %p156
      %p159 = scmp.ne.s32.totalorder %s142, %s158
      %p160 = scmp.eq.s32.totalorder %s24, 0
      %p161 = por %p159, %p160
      %p162 = scmp.le.s32.totalorder 1, %s18
      %p163 = scmp.lt.s32.totalorder %s18, 5
      %p164 = pnand %p162, %p163
      %p165 = pneg %p164
      // Predicated region
      $region9: #{_mlp_pallas.1} parent=5 // pred_check
        _
      $region10: #{_mlp_pallas.1} parent=5 // pred_check_branch
        %167 = sbr.rel (%p164) target = $region12
      $region11: #{_mlp_pallas.1} parent=5 // pred_region
        %s168 = ssub.s32 %s18, 1
        // Predicated region
        $region13: #{_mlp_pallas.1} parent=11 // pred_check
          %p169 = pneg %p65
        $region14: #{_mlp_pallas.1} parent=11 // pred_check_branch
          %171 = sbr.rel (%p169) target = $region16
        $region15: #{_mlp_pallas.1} parent=11 // pred_region
          %s173 = ssub.s32 8192, 8192
          %174 = vsyncadd [#allocation6], %s173
          %s175 = sshll.u32 [#allocation5], 4
          %s176 = int_to_ptr.vmem [resolvable:$true] %s175
          %181 = dma.hbm_to_vmem [thread:$0]  %s1, 8192, %s176, [#allocation6], 256, 256, 16
        $region16: #{_mlp_pallas.1} parent=11 // pred_fallthru
          _
        // Predicated region
        $region17: #{_mlp_pallas.1} parent=11 // pred_check
          %p182 = pneg %p86
        $region18: #{_mlp_pallas.1} parent=11 // pred_check_branch
          %184 = sbr.rel (%p182) target = $region20
        $region19: #{_mlp_pallas.1} parent=11 // pred_region
          _
        $region20: #{_mlp_pallas.1} parent=11 // pred_fallthru
          _
        // Predicated region
        $region21: #{_mlp_pallas.1} parent=11 // pred_check
          %p185 = pneg %p107
        $region22: #{_mlp_pallas.1} parent=11 // pred_check_branch
          %187 = sbr.rel (%p185) target = $region24
        $region23: #{_mlp_pallas.1} parent=11 // pred_region
          %s189 = ssub.s32 8192, 8192
          %190 = vsyncadd [#allocation6], %s189
          %s191 = sshll.u32 [#allocation7], 4
          %s192 = int_to_ptr.vmem [resolvable:$true] %s191
          %197 = dma.hbm_to_vmem [thread:$0]  %s3, 8192, %s192, [#allocation6], 128, 128, 8
        $region24: #{_mlp_pallas.1} parent=11 // pred_fallthru
          _
        // Predicated region
        $region25: #{_mlp_pallas.1} parent=11 // pred_check
          %p198 = pneg %p128
        $region26: #{_mlp_pallas.1} parent=11 // pred_check_branch
          %200 = sbr.rel (%p198) target = $region28
        $region27: #{_mlp_pallas.1} parent=11 // pred_region
          _
        $region28: #{_mlp_pallas.1} parent=11 // pred_fallthru
          _
      $region12: #{_mlp_pallas.1} parent=5 // pred_fallthru
        _
      %p201 = scmp.lt.s32.totalorder %s18, 4
      // Predicated region
      $region29: #{_mlp_pallas.1} parent=5 // pred_check
        %p202 = pneg %p201
      $region30: #{_mlp_pallas.1} parent=5 // pred_check_branch
        %204 = sbr.rel (%p202) target = $region32
      $region31: #{_mlp_pallas.1} parent=5 // pred_region
        // Predicated region
        $region33: #{_mlp_pallas.1} parent=31 // pred_check
          %p205 = pneg %p38
        $region34: #{_mlp_pallas.1} parent=31 // pred_check_branch
          %207 = sbr.rel (%p205) target = $region36
        $region35: #{_mlp_pallas.1} parent=31 // pred_region
          %s208 = sand.u32 %s28, 1
          %s209 = scalar_lea.sflag [#allocation3], %s208
          %s210 = sand.u32 %s28, 1
          %s211 = smul.addr %s210, 128
          %s212 = scalar_lea.vmem [#allocation2], %s211
          %s213 = smul.u32 16, %s18
          %s215 = ssub.s32 2048, 2048
          %216 = vsyncadd %s209, %s215
          %s217 = smul.addr %s213, 2
          %s218 = smul.addr %s217, 64
          %s219 = scalar_lea.hbm %s0, %s218
          %s220 = sshll.u32 %s212, 4
          %s221 = int_to_ptr.vmem [resolvable:$true] %s220
          %226 = dma.hbm_to_vmem [thread:$0]  %s219, 2048, %s221, %s209, 128, 128, 8
        $region36: #{_mlp_pallas.1} parent=31 // pred_fallthru
          _
      $region32: #{_mlp_pallas.1} parent=5 // pred_fallthru
        _
      %p227 = scmp.le.s32.totalorder 1, %s18
      %p228 = scmp.lt.s32.totalorder %s18, 5
      %p229 = pnand %p227, %p228
      %p230 = pneg %p229
      // Predicated region
      $region37: #{_mlp_pallas.1} parent=5 // pred_check
        _
      $region38: #{_mlp_pallas.1} parent=5 // pred_check_branch
        %232 = sbr.rel (%p229) target = $region40
      $region39: #{_mlp_pallas.1} parent=5 // pred_region
        %s233 = ssub.s32 %s18, 1
        %s234 = sand.u32 %s31, 1
        %s235 = scalar_lea.sflag [#allocation3], %s234
        %s236 = sand.u32 %s31, 1
        %s237 = smul.addr %s236, 128
        %s238 = scalar_lea.vmem [#allocation2], %s237
        // Predicated region
        $region41: #{_mlp_pallas.1} parent=39 // pred_check
          %p239 = pneg %p44
        $region42: #{_mlp_pallas.1} parent=39 // pred_check_branch
          %241 = sbr.rel (%p239) target = $region44
        $region43: #{_mlp_pallas.1} parent=39 // pred_region
          %242 = dma.done %s235, 2048
        $region44: #{_mlp_pallas.1} parent=39 // pred_fallthru
          _
        // Predicated region
        $region45: #{_mlp_pallas.1} parent=39 // pred_check
          %p243 = pneg %p65
        $region46: #{_mlp_pallas.1} parent=39 // pred_check_branch
          %245 = sbr.rel (%p243) target = $region48
        $region47: #{_mlp_pallas.1} parent=39 // pred_region
          %246 = dma.done [#allocation6], 8192
        $region48: #{_mlp_pallas.1} parent=39 // pred_fallthru
          _
        // Predicated region
        $region49: #{_mlp_pallas.1} parent=39 // pred_check
          %p247 = pneg %p107
        $region50: #{_mlp_pallas.1} parent=39 // pred_check_branch
          %249 = sbr.rel (%p247) target = $region52
        $region51: #{_mlp_pallas.1} parent=39 // pred_region
          %250 = dma.done [#allocation6], 8192
        $region52: #{_mlp_pallas.1} parent=39 // pred_fallthru
          _
        %s251 = sand.u32 %s31, 1
        %s252 = scalar_lea.sflag [#allocation3], %s251
        %s253 = sand.u32 %s31, 1
        %s254 = smul.addr %s253, 128
        %s255 = scalar_lea.vmem [#allocation2], %s254
        %p256 = pneg %p44
        %p257 = pneg %p41
        %p258 = pneg %p65
        %p259 = pneg %p62
        %p260 = pneg %p86
        %p261 = pneg %p83
        %p262 = pneg %p107
        %p263 = pneg %p104
        %p264 = pneg %p128
        %p265 = pneg %p125
        %p266 = pneg %p154
        %p267 = pneg %p151
        %s268 = sand.u32 %s141, 1
        %s269 = scalar_lea.sflag [#allocation4], %s268
        %s270 = sand.u32 %s141, 1
        %s271 = smul.addr %s270, 128
        %s272 = scalar_lea.vmem [#allocation8], %s271
        %s273 = smul.u32 16, %s23
        %s274 = smul.u32 16, %s23
        %v275 = vld [vmem:[%s238] sm:$0xff]
        %v276 = vld [vmem:[%s238 + $0x8] sm:$0xff]
        %v277 = vld [vmem:[%s238 + $0x10] sm:$0xff]
        %v278 = vld [vmem:[%s238 + $0x18] sm:$0xff]
        %v279 = vld [vmem:[%s238 + $0x20] sm:$0xff]
        %v280 = vld [vmem:[%s238 + $0x28] sm:$0xff]
        %v281 = vld [vmem:[%s238 + $0x30] sm:$0xff]
        %v282 = vld [vmem:[%s238 + $0x38] sm:$0xff]
        %v283 = vld [vmem:[%s238 + $0x40] sm:$0xff]
        %v284 = vld [vmem:[%s238 + $0x48] sm:$0xff]
        %v285 = vld [vmem:[%s238 + $0x50] sm:$0xff]
        %v286 = vld [vmem:[%s238 + $0x58] sm:$0xff]
        %v287 = vld [vmem:[%s238 + $0x60] sm:$0xff]
        %v288 = vld [vmem:[%s238 + $0x68] sm:$0xff]
        %v289 = vld [vmem:[%s238 + $0x70] sm:$0xff]
        %v290 = vld [vmem:[%s238 + $0x78] sm:$0xff]
        %v291 = vld [vmem:[#allocation5] sm:$0xff]
        %v292 = vld [vmem:[#allocation5 + $0x8] sm:$0xff]
        %v293 = vld [vmem:[#allocation5 + $0x10] sm:$0xff]
        %v294 = vld [vmem:[#allocation5 + $0x18] sm:$0xff]
        %v295 = vld [vmem:[#allocation5 + $0x20] sm:$0xff]
        %v296 = vld [vmem:[#allocation5 + $0x28] sm:$0xff]
        %v297 = vld [vmem:[#allocation5 + $0x30] sm:$0xff]
        %v298 = vld [vmem:[#allocation5 + $0x38] sm:$0xff]
        %v299 = vld [vmem:[#allocation5 + $0x40] sm:$0xff]
        %v300 = vld [vmem:[#allocation5 + $0x48] sm:$0xff]
        %v301 = vld [vmem:[#allocation5 + $0x50] sm:$0xff]
        %v302 = vld [vmem:[#allocation5 + $0x58] sm:$0xff]
        %v303 = vld [vmem:[#allocation5 + $0x60] sm:$0xff]
        %v304 = vld [vmem:[#allocation5 + $0x68] sm:$0xff]
        %v305 = vld [vmem:[#allocation5 + $0x70] sm:$0xff]
        %v306 = vld [vmem:[#allocation5 + $0x78] sm:$0xff]
        %v307 = vld [vmem:[#allocation5 + $0x80] sm:$0xff]
        %v308 = vld [vmem:[#allocation5 + $0x88] sm:$0xff]
        %v309 = vld [vmem:[#allocation5 + $0x90] sm:$0xff]
        %v310 = vld [vmem:[#allocation5 + $0x98] sm:$0xff]
        %v311 = vld [vmem:[#allocation5 + $0xa0] sm:$0xff]
        %v312 = vld [vmem:[#allocation5 + $0xa8] sm:$0xff]
        %v313 = vld [vmem:[#allocation5 + $0xb0] sm:$0xff]
        %v314 = vld [vmem:[#allocation5 + $0xb8] sm:$0xff]
        %v315 = vld [vmem:[#allocation5 + $0xc0] sm:$0xff]
        %v316 = vld [vmem:[#allocation5 + $0xc8] sm:$0xff]
        %v317 = vld [vmem:[#allocation5 + $0xd0] sm:$0xff]
        %v318 = vld [vmem:[#allocation5 + $0xd8] sm:$0xff]
        %v319 = vld [vmem:[#allocation5 + $0xe0] sm:$0xff]
        %v320 = vld [vmem:[#allocation5 + $0xe8] sm:$0xff]
        %v321 = vld [vmem:[#allocation5 + $0xf0] sm:$0xff]
        %v322 = vld [vmem:[#allocation5 + $0xf8] sm:$0xff]
        %v323 = vld [vmem:[#allocation5 + $0x100] sm:$0xff]
        %v324 = vld [vmem:[#allocation5 + $0x108] sm:$0xff]
        %v325 = vld [vmem:[#allocation5 + $0x110] sm:$0xff]
        %v326 = vld [vmem:[#allocation5 + $0x118] sm:$0xff]
        %v327 = vld [vmem:[#allocation5 + $0x120] sm:$0xff]
        %v328 = vld [vmem:[#allocation5 + $0x128] sm:$0xff]
        %v329 = vld [vmem:[#allocation5 + $0x130] sm:$0xff]
        %v330 = vld [vmem:[#allocation5 + $0x138] sm:$0xff]
        %v331 = vld [vmem:[#allocation5 + $0x140] sm:$0xff]
        %v332 = vld [vmem:[#allocation5 + $0x148] sm:$0xff]
        %v333 = vld [vmem:[#allocation5 + $0x150] sm:$0xff]
        %v334 = vld [vmem:[#allocation5 + $0x158] sm:$0xff]
        %v335 = vld [vmem:[#allocation5 + $0x160] sm:$0xff]
        %v336 = vld [vmem:[#allocation5 + $0x168] sm:$0xff]
        %v337 = vld [vmem:[#allocation5 + $0x170] sm:$0xff]
        %v338 = vld [vmem:[#allocation5 + $0x178] sm:$0xff]
        %v339 = vld [vmem:[#allocation5 + $0x180] sm:$0xff]
        %v340 = vld [vmem:[#allocation5 + $0x188] sm:$0xff]
        %v341 = vld [vmem:[#allocation5 + $0x190] sm:$0xff]
        %v342 = vld [vmem:[#allocation5 + $0x198] sm:$0xff]
        %v343 = vld [vmem:[#allocation5 + $0x1a0] sm:$0xff]
        %v344 = vld [vmem:[#allocation5 + $0x1a8] sm:$0xff]
        %v345 = vld [vmem:[#allocation5 + $0x1b0] sm:$0xff]
        %v346 = vld [vmem:[#allocation5 + $0x1b8] sm:$0xff]
        %v347 = vld [vmem:[#allocation5 + $0x1c0] sm:$0xff]
        %v348 = vld [vmem:[#allocation5 + $0x1c8] sm:$0xff]
        %v349 = vld [vmem:[#allocation5 + $0x1d0] sm:$0xff]
        %v350 = vld [vmem:[#allocation5 + $0x1d8] sm:$0xff]
        %v351 = vld [vmem:[#allocation5 + $0x1e0] sm:$0xff]
        %v352 = vld [vmem:[#allocation5 + $0x1e8] sm:$0xff]
        %v353 = vld [vmem:[#allocation5 + $0x1f0] sm:$0xff]
        %v354 = vld [vmem:[#allocation5 + $0x1f8] sm:$0xff]
        %v355 = vld [vmem:[%s2] sm:$0xf]
        %v357 = vlaneseq
        %v358 = vshrl.u32 %v357, 7
        %v359 = vsub.s32 0, %v358
        %v360 = vrot.slane %v355, %v359
        %v361 = vlaneseq
        %v362 = vshrl.u32 %v361, 7
        %v363 = vsub.s32 1, %v362
        %v364 = vrot.slane %v355, %v363
        %v365 = vlaneseq
        %v366 = vshrl.u32 %v365, 7
        %v367 = vsub.s32 2, %v366
        %v368 = vrot.slane %v355, %v367
        %v369 = vlaneseq
        %v370 = vshrl.u32 %v369, 7
        %v371 = vsub.s32 3, %v370
        %v372 = vrot.slane %v355, %v371
        %v393 = vunpack.c.l.b16 %v275
        %v394 = vunpack.c.h.b16 %v275
        %v395 = vunpack.c.l.b16 %v276
        %v396 = vunpack.c.h.b16 %v276
        %v397 = vunpack.c.l.b16 %v277
        %v398 = vunpack.c.h.b16 %v277
        %v399 = vunpack.c.l.b16 %v278
        %v400 = vunpack.c.h.b16 %v278
        %v401 = vunpack.c.l.b16 %v279
        %v402 = vunpack.c.h.b16 %v279
        %v403 = vunpack.c.l.b16 %v280
        %v404 = vunpack.c.h.b16 %v280
        %v405 = vunpack.c.l.b16 %v281
        %v406 = vunpack.c.h.b16 %v281
        %v407 = vunpack.c.l.b16 %v282
        %v408 = vunpack.c.h.b16 %v282
        %v409 = vunpack.c.l.b16 %v283
        %v410 = vunpack.c.h.b16 %v283
        %v411 = vunpack.c.l.b16 %v284
        %v412 = vunpack.c.h.b16 %v284
        %v413 = vunpack.c.l.b16 %v285
        %v414 = vunpack.c.h.b16 %v285
        %v415 = vunpack.c.l.b16 %v286
        %v416 = vunpack.c.h.b16 %v286
        %v417 = vunpack.c.l.b16 %v287
        %v418 = vunpack.c.h.b16 %v287
        %v419 = vunpack.c.l.b16 %v288
        %v420 = vunpack.c.h.b16 %v288
        %v421 = vunpack.c.l.b16 %v289
        %v422 = vunpack.c.h.b16 %v289
        %v423 = vunpack.c.l.b16 %v290
        %v424 = vunpack.c.h.b16 %v290
        %v425 = vpack.c.b16 %v395, %v393
        %v426 = vpack.c.b16 %v396, %v394
        %v427 = vpack.c.b16 %v399, %v397
        %v428 = vpack.c.b16 %v400, %v398
        %v429 = vpack.c.b16 %v403, %v401
        %v430 = vpack.c.b16 %v404, %v402
        %v431 = vpack.c.b16 %v407, %v405
        %v432 = vpack.c.b16 %v408, %v406
        %v433 = vpack.c.b16 %v411, %v409
        %v434 = vpack.c.b16 %v412, %v410
        %v435 = vpack.c.b16 %v415, %v413
        %v436 = vpack.c.b16 %v416, %v414
        %v437 = vpack.c.b16 %v419, %v417
        %v438 = vpack.c.b16 %v420, %v418
        %v439 = vpack.c.b16 %v423, %v421
        %v440 = vpack.c.b16 %v424, %v422
        %v521 = vunpack.c.l.b16 %v291
        %v522 = vunpack.c.h.b16 %v291
        %v523 = vunpack.c.l.b16 %v292
        %v524 = vunpack.c.h.b16 %v292
        %v525 = vunpack.c.l.b16 %v293
        %v526 = vunpack.c.h.b16 %v293
        %v527 = vunpack.c.l.b16 %v294
        %v528 = vunpack.c.h.b16 %v294
        %v529 = vunpack.c.l.b16 %v295
        %v530 = vunpack.c.h.b16 %v295
        %v531 = vunpack.c.l.b16 %v296
        %v532 = vunpack.c.h.b16 %v296
        %v533 = vunpack.c.l.b16 %v297
        %v534 = vunpack.c.h.b16 %v297
        %v535 = vunpack.c.l.b16 %v298
        %v536 = vunpack.c.h.b16 %v298
        %v537 = vunpack.c.l.b16 %v299
        %v538 = vunpack.c.h.b16 %v299
        %v539 = vunpack.c.l.b16 %v300
        %v540 = vunpack.c.h.b16 %v300
        %v541 = vunpack.c.l.b16 %v301
        %v542 = vunpack.c.h.b16 %v301
        %v543 = vunpack.c.l.b16 %v302
        %v544 = vunpack.c.h.b16 %v302
        %v545 = vunpack.c.l.b16 %v303
        %v546 = vunpack.c.h.b16 %v303
        %v547 = vunpack.c.l.b16 %v304
        %v548 = vunpack.c.h.b16 %v304
        %v549 = vunpack.c.l.b16 %v305
        %v550 = vunpack.c.h.b16 %v305
        %v551 = vunpack.c.l.b16 %v306
        %v552 = vunpack.c.h.b16 %v306
        %v553 = vunpack.c.l.b16 %v307
        %v554 = vunpack.c.h.b16 %v307
        %v555 = vunpack.c.l.b16 %v308
        %v556 = vunpack.c.h.b16 %v308
        %v557 = vunpack.c.l.b16 %v309
        %v558 = vunpack.c.h.b16 %v309
        %v559 = vunpack.c.l.b16 %v310
        %v560 = vunpack.c.h.b16 %v310
        %v561 = vunpack.c.l.b16 %v311
        %v562 = vunpack.c.h.b16 %v311
        %v563 = vunpack.c.l.b16 %v312
        %v564 = vunpack.c.h.b16 %v312
        %v565 = vunpack.c.l.b16 %v313
        %v566 = vunpack.c.h.b16 %v313
        %v567 = vunpack.c.l.b16 %v314
        %v568 = vunpack.c.h.b16 %v314
        %v569 = vunpack.c.l.b16 %v315
        %v570 = vunpack.c.h.b16 %v315
        %v571 = vunpack.c.l.b16 %v316
        %v572 = vunpack.c.h.b16 %v316
        %v573 = vunpack.c.l.b16 %v317
        %v574 = vunpack.c.h.b16 %v317
        %v575 = vunpack.c.l.b16 %v318
        %v576 = vunpack.c.h.b16 %v318
        %v577 = vunpack.c.l.b16 %v319
        %v578 = vunpack.c.h.b16 %v319
        %v579 = vunpack.c.l.b16 %v320
        %v580 = vunpack.c.h.b16 %v320
        %v581 = vunpack.c.l.b16 %v321
        %v582 = vunpack.c.h.b16 %v321
        %v583 = vunpack.c.l.b16 %v322
        %v584 = vunpack.c.h.b16 %v322
        %v585 = vunpack.c.l.b16 %v323
        %v586 = vunpack.c.h.b16 %v323
        %v587 = vunpack.c.l.b16 %v324
        %v588 = vunpack.c.h.b16 %v324
        %v589 = vunpack.c.l.b16 %v325
        %v590 = vunpack.c.h.b16 %v325
        %v591 = vunpack.c.l.b16 %v326
        %v592 = vunpack.c.h.b16 %v326
        %v593 = vunpack.c.l.b16 %v327
        %v594 = vunpack.c.h.b16 %v327
        %v595 = vunpack.c.l.b16 %v328
        %v596 = vunpack.c.h.b16 %v328
        %v597 = vunpack.c.l.b16 %v329
        %v598 = vunpack.c.h.b16 %v329
        %v599 = vunpack.c.l.b16 %v330
        %v600 = vunpack.c.h.b16 %v330
        %v601 = vunpack.c.l.b16 %v331
        %v602 = vunpack.c.h.b16 %v331
        %v603 = vunpack.c.l.b16 %v332
        %v604 = vunpack.c.h.b16 %v332
        %v605 = vunpack.c.l.b16 %v333
        %v606 = vunpack.c.h.b16 %v333
        %v607 = vunpack.c.l.b16 %v334
        %v608 = vunpack.c.h.b16 %v334
        %v609 = vunpack.c.l.b16 %v335
        %v610 = vunpack.c.h.b16 %v335
        %v611 = vunpack.c.l.b16 %v336
        %v612 = vunpack.c.h.b16 %v336
        %v613 = vunpack.c.l.b16 %v337
        %v614 = vunpack.c.h.b16 %v337
        %v615 = vunpack.c.l.b16 %v338
        %v616 = vunpack.c.h.b16 %v338
        %v617 = vunpack.c.l.b16 %v339
        %v618 = vunpack.c.h.b16 %v339
        %v619 = vunpack.c.l.b16 %v340
        %v620 = vunpack.c.h.b16 %v340
        %v621 = vunpack.c.l.b16 %v341
        %v622 = vunpack.c.h.b16 %v341
        %v623 = vunpack.c.l.b16 %v342
        %v624 = vunpack.c.h.b16 %v342
        %v625 = vunpack.c.l.b16 %v343
        %v626 = vunpack.c.h.b16 %v343
        %v627 = vunpack.c.l.b16 %v344
        %v628 = vunpack.c.h.b16 %v344
        %v629 = vunpack.c.l.b16 %v345
        %v630 = vunpack.c.h.b16 %v345
        %v631 = vunpack.c.l.b16 %v346
        %v632 = vunpack.c.h.b16 %v346
        %v633 = vunpack.c.l.b16 %v347
        %v634 = vunpack.c.h.b16 %v347
        %v635 = vunpack.c.l.b16 %v348
        %v636 = vunpack.c.h.b16 %v348
        %v637 = vunpack.c.l.b16 %v349
        %v638 = vunpack.c.h.b16 %v349
        %v639 = vunpack.c.l.b16 %v350
        %v640 = vunpack.c.h.b16 %v350
        %v641 = vunpack.c.l.b16 %v351
        %v642 = vunpack.c.h.b16 %v351
        %v643 = vunpack.c.l.b16 %v352
        %v644 = vunpack.c.h.b16 %v352
        %v645 = vunpack.c.l.b16 %v353
        %v646 = vunpack.c.h.b16 %v353
        %v647 = vunpack.c.l.b16 %v354
        %v648 = vunpack.c.h.b16 %v354
        %v649 = vpack.c.b16 %v525, %v521
        %v650 = vpack.c.b16 %v526, %v522
        %v651 = vpack.c.b16 %v527, %v523
        %v652 = vpack.c.b16 %v528, %v524
        %v653 = vpack.c.b16 %v533, %v529
        %v654 = vpack.c.b16 %v534, %v530
        %v655 = vpack.c.b16 %v535, %v531
        %v656 = vpack.c.b16 %v536, %v532
        %v657 = vpack.c.b16 %v541, %v537
        %v658 = vpack.c.b16 %v542, %v538
        %v659 = vpack.c.b16 %v543, %v539
        %v660 = vpack.c.b16 %v544, %v540
        %v661 = vpack.c.b16 %v549, %v545
        %v662 = vpack.c.b16 %v550, %v546
        %v663 = vpack.c.b16 %v551, %v547
        %v664 = vpack.c.b16 %v552, %v548
        %v665 = vpack.c.b16 %v557, %v553
        %v666 = vpack.c.b16 %v558, %v554
        %v667 = vpack.c.b16 %v559, %v555
        %v668 = vpack.c.b16 %v560, %v556
        %v669 = vpack.c.b16 %v565, %v561
        %v670 = vpack.c.b16 %v566, %v562
        %v671 = vpack.c.b16 %v567, %v563
        %v672 = vpack.c.b16 %v568, %v564
        %v673 = vpack.c.b16 %v573, %v569
        %v674 = vpack.c.b16 %v574, %v570
        %v675 = vpack.c.b16 %v575, %v571
        %v676 = vpack.c.b16 %v576, %v572
        %v677 = vpack.c.b16 %v581, %v577
        %v678 = vpack.c.b16 %v582, %v578
        %v679 = vpack.c.b16 %v583, %v579
        %v680 = vpack.c.b16 %v584, %v580
        %v681 = vpack.c.b16 %v589, %v585
        %v682 = vpack.c.b16 %v590, %v586
        %v683 = vpack.c.b16 %v591, %v587
        %v684 = vpack.c.b16 %v592, %v588
        %v685 = vpack.c.b16 %v597, %v593
        %v686 = vpack.c.b16 %v598, %v594
        %v687 = vpack.c.b16 %v599, %v595
        %v688 = vpack.c.b16 %v600, %v596
        %v689 = vpack.c.b16 %v605, %v601
        %v690 = vpack.c.b16 %v606, %v602
        %v691 = vpack.c.b16 %v607, %v603
        %v692 = vpack.c.b16 %v608, %v604
        %v693 = vpack.c.b16 %v613, %v609
        %v694 = vpack.c.b16 %v614, %v610
        %v695 = vpack.c.b16 %v615, %v611
        %v696 = vpack.c.b16 %v616, %v612
        %v697 = vpack.c.b16 %v621, %v617
        %v698 = vpack.c.b16 %v622, %v618
        %v699 = vpack.c.b16 %v623, %v619
        %v700 = vpack.c.b16 %v624, %v620
        %v701 = vpack.c.b16 %v629, %v625
        %v702 = vpack.c.b16 %v630, %v626
        %v703 = vpack.c.b16 %v631, %v627
        %v704 = vpack.c.b16 %v632, %v628
        %v705 = vpack.c.b16 %v637, %v633
        %v706 = vpack.c.b16 %v638, %v634
        %v707 = vpack.c.b16 %v639, %v635
        %v708 = vpack.c.b16 %v640, %v636
        %v709 = vpack.c.b16 %v645, %v641
        %v710 = vpack.c.b16 %v646, %v642
        %v711 = vpack.c.b16 %v647, %v643
        %v712 = vpack.c.b16 %v648, %v644
        %777 = vmatprep.subr.bf16.mxu0 %v650
        %778 = vmatpush1.bf16.msra.mxu0 %v649
        %779 = vmatprep.subr.bf16.mxu0 %v654
        %780 = vmatpush1.bf16.msra.mxu0 %v653
        %781 = vmatprep.subr.bf16.mxu0 %v658
        %782 = vmatpush1.bf16.msra.mxu0 %v657
        %783 = vmatprep.subr.bf16.mxu0 %v662
        %784 = vmatpush1.bf16.msra.mxu0 %v661
        %785 = vmatprep.subr.bf16.mxu0 %v666
        %786 = vmatpush1.bf16.msra.mxu0 %v665
        %787 = vmatprep.subr.bf16.mxu0 %v670
        %788 = vmatpush1.bf16.msra.mxu0 %v669
        %789 = vmatprep.subr.bf16.mxu0 %v674
        %790 = vmatpush1.bf16.msra.mxu0 %v673
        %791 = vmatprep.subr.bf16.mxu0 %v678
        %792 = vmatpush1.bf16.msra.mxu0 %v677
        %793 = vmatprep.subr.bf16.mxu0 %v682
        %794 = vmatpush1.bf16.msra.mxu0 %v681
        %795 = vmatprep.subr.bf16.mxu0 %v686
        %796 = vmatpush1.bf16.msra.mxu0 %v685
        %797 = vmatprep.subr.bf16.mxu0 %v690
        %798 = vmatpush1.bf16.msra.mxu0 %v689
        %799 = vmatprep.subr.bf16.mxu0 %v694
        %800 = vmatpush1.bf16.msra.mxu0 %v693
        %801 = vmatprep.subr.bf16.mxu0 %v698
        %802 = vmatpush1.bf16.msra.mxu0 %v697
        %803 = vmatprep.subr.bf16.mxu0 %v702
        %804 = vmatpush1.bf16.msra.mxu0 %v701
        %805 = vmatprep.subr.bf16.mxu0 %v706
        %806 = vmatpush1.bf16.msra.mxu0 %v705
        %807 = vmatprep.subr.bf16.mxu0 %v710
        %808 = vmatpush1.bf16.msra.mxu0 %v709
        %809 = vmatprep.mubr.bf16.mxu0 %v426
        %810 = vmatmul.mubr.bf16.gmra.mrb[0].mxu0 %v425
        %v811 = vpop.f32.mrb[0].mxu0
        %v812 = vadd.f32 %v360, %v811
        %v813 = vpop.f32.mrb[0].mxu0
        %v814 = vadd.f32 %v364, %v813
        %v815 = vpop.f32.mrb[0].mxu0
        %v816 = vadd.f32 %v360, %v815
        %v817 = vpop.f32.mrb[0].mxu0
        %v818 = vadd.f32 %v364, %v817
        %819 = vmatprep.mubr.bf16.mxu0 %v428
        %820 = vmatmul.mubr.bf16.gmra.mrb[0].mxu0 %v427
        %v821 = vpop.f32.mrb[0].mxu0
        %v822 = vadd.f32 %v360, %v821
        %v823 = vpop.f32.mrb[0].mxu0
        %v824 = vadd.f32 %v364, %v823
        %v825 = vpop.f32.mrb[0].mxu0
        %v826 = vadd.f32 %v360, %v825
        %v827 = vpop.f32.mrb[0].mxu0
        %v828 = vadd.f32 %v364, %v827
        %829 = vmatprep.mubr.bf16.mxu0 %v430
        %830 = vmatmul.mubr.bf16.gmra.mrb[0].mxu0 %v429
        %v831 = vpop.f32.mrb[0].mxu0
        %v832 = vadd.f32 %v360, %v831
        %v833 = vpop.f32.mrb[0].mxu0
        %v834 = vadd.f32 %v364, %v833
        %v835 = vpop.f32.mrb[0].mxu0
        %v836 = vadd.f32 %v360, %v835
        %v837 = vpop.f32.mrb[0].mxu0
        %v838 = vadd.f32 %v364, %v837
        %839 = vmatprep.mubr.bf16.mxu0 %v432
        %840 = vmatmul.mubr.bf16.gmra.mrb[0].mxu0 %v431
        %v841 = vpop.f32.mrb[0].mxu0
        %v842 = vadd.f32 %v360, %v841
        %v843 = vpop.f32.mrb[0].mxu0
        %v844 = vadd.f32 %v364, %v843
        %v845 = vpop.f32.mrb[0].mxu0
        %v846 = vadd.f32 %v360, %v845
        %v847 = vpop.f32.mrb[0].mxu0
        %v848 = vadd.f32 %v364, %v847
        %849 = vmatprep.mubr.bf16.mxu0 %v434
        %850 = vmatmul.mubr.bf16.gmra.mrb[0].mxu0 %v433
        %v851 = vpop.f32.mrb[0].mxu0
        %v852 = vadd.f32 %v360, %v851
        %v853 = vpop.f32.mrb[0].mxu0
        %v854 = vadd.f32 %v364, %v853
        %v855 = vpop.f32.mrb[0].mxu0
        %v856 = vadd.f32 %v360, %v855
        %v857 = vpop.f32.mrb[0].mxu0
        %v858 = vadd.f32 %v364, %v857
        %859 = vmatprep.mubr.bf16.mxu0 %v436
        %860 = vmatmul.mubr.bf16.gmra.mrb[0].mxu0 %v435
        %v861 = vpop.f32.mrb[0].mxu0
        %v862 = vadd.f32 %v360, %v861
        %v863 = vpop.f32.mrb[0].mxu0
        %v864 = vadd.f32 %v364, %v863
        %v865 = vpop.f32.mrb[0].mxu0
        %v866 = vadd.f32 %v360, %v865
        %v867 = vpop.f32.mrb[0].mxu0
        %v868 = vadd.f32 %v364, %v867
        %869 = vmatprep.mubr.bf16.mxu0 %v438
        %870 = vmatmul.mubr.bf16.gmra.mrb[0].mxu0 %v437
        %v871 = vpop.f32.mrb[0].mxu0
        %v872 = vadd.f32 %v360, %v871
        %v873 = vpop.f32.mrb[0].mxu0
        %v874 = vadd.f32 %v364, %v873
        %v875 = vpop.f32.mrb[0].mxu0
        %v876 = vadd.f32 %v360, %v875
        %v877 = vpop.f32.mrb[0].mxu0
        %v878 = vadd.f32 %v364, %v877
        %879 = vmatprep.mubr.bf16.mxu0 %v440
        %880 = vmatmul.mubr.bf16.gmra.mrb[0].mxu0 %v439
        %v881 = vpop.f32.mrb[0].mxu0
        %v882 = vadd.f32 %v360, %v881
        %v883 = vpop.f32.mrb[0].mxu0
        %v884 = vadd.f32 %v364, %v883
        %v885 = vpop.f32.mrb[0].mxu0
        %v886 = vadd.f32 %v360, %v885
        %v887 = vpop.f32.mrb[0].mxu0
        %v888 = vadd.f32 %v364, %v887
        %889 = vdwg.mxu0
        %890 = vmatprep.subr.bf16.mxu0 %v652
        %891 = vmatpush1.bf16.msra.mxu0 %v651
        %892 = vmatprep.subr.bf16.mxu0 %v656
        %893 = vmatpush1.bf16.msra.mxu0 %v655
        %894 = vmatprep.subr.bf16.mxu0 %v660
        %895 = vmatpush1.bf16.msra.mxu0 %v659
        %896 = vmatprep.subr.bf16.mxu0 %v664
        %897 = vmatpush1.bf16.msra.mxu0 %v663
        %898 = vmatprep.subr.bf16.mxu0 %v668
        %899 = vmatpush1.bf16.msra.mxu0 %v667
        %900 = vmatprep.subr.bf16.mxu0 %v672
        %901 = vmatpush1.bf16.msra.mxu0 %v671
        %902 = vmatprep.subr.bf16.mxu0 %v676
        %903 = vmatpush1.bf16.msra.mxu0 %v675
        %904 = vmatprep.subr.bf16.mxu0 %v680
        %905 = vmatpush1.bf16.msra.mxu0 %v679
        %906 = vmatprep.subr.bf16.mxu0 %v684
        %907 = vmatpush1.bf16.msra.mxu0 %v683
        %908 = vmatprep.subr.bf16.mxu0 %v688
        %909 = vmatpush1.bf16.msra.mxu0 %v687
        %910 = vmatprep.subr.bf16.mxu0 %v692
        %911 = vmatpush1.bf16.msra.mxu0 %v691
        %912 = vmatprep.subr.bf16.mxu0 %v696
        %913 = vmatpush1.bf16.msra.mxu0 %v695
        %914 = vmatprep.subr.bf16.mxu0 %v700
        %915 = vmatpush1.bf16.msra.mxu0 %v699
        %916 = vmatprep.subr.bf16.mxu0 %v704
        %917 = vmatpush1.bf16.msra.mxu0 %v703
        %918 = vmatprep.subr.bf16.mxu0 %v708
        %919 = vmatpush1.bf16.msra.mxu0 %v707
        %920 = vmatprep.subr.bf16.mxu0 %v712
        %921 = vmatpush1.bf16.msra.mxu0 %v711
        %922 = vmatprep.mubr.bf16.mxu0 %v426
        %923 = vmatmul.mubr.bf16.gmra.mrb[0].mxu0 %v425
        %v924 = vpop.f32.mrb[0].mxu0
        %v925 = vadd.f32 %v368, %v924
        %v926 = vpop.f32.mrb[0].mxu0
        %v927 = vadd.f32 %v372, %v926
        %v928 = vpop.f32.mrb[0].mxu0
        %v929 = vadd.f32 %v368, %v928
        %v930 = vpop.f32.mrb[0].mxu0
        %v931 = vadd.f32 %v372, %v930
        %932 = vmatprep.mubr.bf16.mxu0 %v428
        %933 = vmatmul.mubr.bf16.gmra.mrb[0].mxu0 %v427
        %v934 = vpop.f32.mrb[0].mxu0
        %v935 = vadd.f32 %v368, %v934
        %v936 = vpop.f32.mrb[0].mxu0
        %v937 = vadd.f32 %v372, %v936
        %v938 = vpop.f32.mrb[0].mxu0
        %v939 = vadd.f32 %v368, %v938
        %v940 = vpop.f32.mrb[0].mxu0
        %v941 = vadd.f32 %v372, %v940
        %942 = vmatprep.mubr.bf16.mxu0 %v430
        %943 = vmatmul.mubr.bf16.gmra.mrb[0].mxu0 %v429
        %v944 = vpop.f32.mrb[0].mxu0
        %v945 = vadd.f32 %v368, %v944
        %v946 = vpop.f32.mrb[0].mxu0
        %v947 = vadd.f32 %v372, %v946
        %v948 = vpop.f32.mrb[0].mxu0
        %v949 = vadd.f32 %v368, %v948
        %v950 = vpop.f32.mrb[0].mxu0
        %v951 = vadd.f32 %v372, %v950
        %952 = vmatprep.mubr.bf16.mxu0 %v432
        %953 = vmatmul.mubr.bf16.gmra.mrb[0].mxu0 %v431
        %v954 = vpop.f32.mrb[0].mxu0
        %v955 = vadd.f32 %v368, %v954
        %v956 = vpop.f32.mrb[0].mxu0
        %v957 = vadd.f32 %v372, %v956
        %v958 = vpop.f32.mrb[0].mxu0
        %v959 = vadd.f32 %v368, %v958
        %v960 = vpop.f32.mrb[0].mxu0
        %v961 = vadd.f32 %v372, %v960
        %962 = vmatprep.mubr.bf16.mxu0 %v434
        %963 = vmatmul.mubr.bf16.gmra.mrb[0].mxu0 %v433
        %v964 = vpop.f32.mrb[0].mxu0
        %v965 = vadd.f32 %v368, %v964
        %v966 = vpop.f32.mrb[0].mxu0
        %v967 = vadd.f32 %v372, %v966
        %v968 = vpop.f32.mrb[0].mxu0
        %v969 = vadd.f32 %v368, %v968
        %v970 = vpop.f32.mrb[0].mxu0
        %v971 = vadd.f32 %v372, %v970
        %972 = vmatprep.mubr.bf16.mxu0 %v436
        %973 = vmatmul.mubr.bf16.gmra.mrb[0].mxu0 %v435
        %v974 = vpop.f32.mrb[0].mxu0
        %v975 = vadd.f32 %v368, %v974
        %v976 = vpop.f32.mrb[0].mxu0
        %v977 = vadd.f32 %v372, %v976
        %v978 = vpop.f32.mrb[0].mxu0
        %v979 = vadd.f32 %v368, %v978
        %v980 = vpop.f32.mrb[0].mxu0
        %v981 = vadd.f32 %v372, %v980
        %982 = vmatprep.mubr.bf16.mxu0 %v438
        %983 = vmatmul.mubr.bf16.gmra.mrb[0].mxu0 %v437
        %v984 = vpop.f32.mrb[0].mxu0
        %v985 = vadd.f32 %v368, %v984
        %v986 = vpop.f32.mrb[0].mxu0
        %v987 = vadd.f32 %v372, %v986
        %v988 = vpop.f32.mrb[0].mxu0
        %v989 = vadd.f32 %v368, %v988
        %v990 = vpop.f32.mrb[0].mxu0
        %v991 = vadd.f32 %v372, %v990
        %992 = vmatprep.mubr.bf16.mxu0 %v440
        %993 = vmatmul.mubr.bf16.gmra.mrb[0].mxu0 %v439
        %v994 = vpop.f32.mrb[0].mxu0
        %v995 = vadd.f32 %v368, %v994
        %v996 = vpop.f32.mrb[0].mxu0
        %v997 = vadd.f32 %v372, %v996
        %v998 = vpop.f32.mrb[0].mxu0
        %v999 = vadd.f32 %v368, %v998
        %v1000 = vpop.f32.mrb[0].mxu0
        %v1001 = vadd.f32 %v372, %v1000
        %1002 = vdwg.mxu0
        %v1003 = vmul.f32 %v812, %v812
        %v1004 = vmul.f32 %v814, %v814
        %v1005 = vmul.f32 %v925, %v925
        %v1006 = vmul.f32 %v927, %v927
        %v1007 = vmul.f32 %v816, %v816
        %v1008 = vmul.f32 %v818, %v818
        %v1009 = vmul.f32 %v929, %v929
        %v1010 = vmul.f32 %v931, %v931
        %v1011 = vmul.f32 %v822, %v822
        %v1012 = vmul.f32 %v824, %v824
        %v1013 = vmul.f32 %v935, %v935
        %v1014 = vmul.f32 %v937, %v937
        %v1015 = vmul.f32 %v826, %v826
        %v1016 = vmul.f32 %v828, %v828
        %v1017 = vmul.f32 %v939, %v939
        %v1018 = vmul.f32 %v941, %v941
        %v1019 = vmul.f32 %v832, %v832
        %v1020 = vmul.f32 %v834, %v834
        %v1021 = vmul.f32 %v945, %v945
        %v1022 = vmul.f32 %v947, %v947
        %v1023 = vmul.f32 %v836, %v836
        %v1024 = vmul.f32 %v838, %v838
        %v1025 = vmul.f32 %v949, %v949
        %v1026 = vmul.f32 %v951, %v951
        %v1027 = vmul.f32 %v842, %v842
        %v1028 = vmul.f32 %v844, %v844
        %v1029 = vmul.f32 %v955, %v955
        %v1030 = vmul.f32 %v957, %v957
        %v1031 = vmul.f32 %v846, %v846
        %v1032 = vmul.f32 %v848, %v848
        %v1033 = vmul.f32 %v959, %v959
        %v1034 = vmul.f32 %v961, %v961
        %v1035 = vmul.f32 %v852, %v852
        %v1036 = vmul.f32 %v854, %v854
        %v1037 = vmul.f32 %v965, %v965
        %v1038 = vmul.f32 %v967, %v967
        %v1039 = vmul.f32 %v856, %v856
        %v1040 = vmul.f32 %v858, %v858
        %v1041 = vmul.f32 %v969, %v969
        %v1042 = vmul.f32 %v971, %v971
        %v1043 = vmul.f32 %v862, %v862
        %v1044 = vmul.f32 %v864, %v864
        %v1045 = vmul.f32 %v975, %v975
        %v1046 = vmul.f32 %v977, %v977
        %v1047 = vmul.f32 %v866, %v866
        %v1048 = vmul.f32 %v868, %v868
        %v1049 = vmul.f32 %v979, %v979
        %v1050 = vmul.f32 %v981, %v981
        %v1051 = vmul.f32 %v872, %v872
        %v1052 = vmul.f32 %v874, %v874
        %v1053 = vmul.f32 %v985, %v985
        %v1054 = vmul.f32 %v987, %v987
        %v1055 = vmul.f32 %v876, %v876
        %v1056 = vmul.f32 %v878, %v878
        %v1057 = vmul.f32 %v989, %v989
        %v1058 = vmul.f32 %v991, %v991
        %v1059 = vmul.f32 %v882, %v882
        %v1060 = vmul.f32 %v884, %v884
        %v1061 = vmul.f32 %v995, %v995
        %v1062 = vmul.f32 %v997, %v997
        %v1063 = vmul.f32 %v886, %v886
        %v1064 = vmul.f32 %v888, %v888
        %v1065 = vmul.f32 %v999, %v999
        %v1066 = vmul.f32 %v1001, %v1001
        %v1067 = vmul.f32 %v812, %v1003
        %v1068 = vmul.f32 %v814, %v1004
        %v1069 = vmul.f32 %v925, %v1005
        %v1070 = vmul.f32 %v927, %v1006
        %v1071 = vmul.f32 %v816, %v1007
        %v1072 = vmul.f32 %v818, %v1008
        %v1073 = vmul.f32 %v929, %v1009
        %v1074 = vmul.f32 %v931, %v1010
        %v1075 = vmul.f32 %v822, %v1011
        %v1076 = vmul.f32 %v824, %v1012
        %v1077 = vmul.f32 %v935, %v1013
        %v1078 = vmul.f32 %v937, %v1014
        %v1079 = vmul.f32 %v826, %v1015
        %v1080 = vmul.f32 %v828, %v1016
        %v1081 = vmul.f32 %v939, %v1017
        %v1082 = vmul.f32 %v941, %v1018
        %v1083 = vmul.f32 %v832, %v1019
        %v1084 = vmul.f32 %v834, %v1020
        %v1085 = vmul.f32 %v945, %v1021
        %v1086 = vmul.f32 %v947, %v1022
        %v1087 = vmul.f32 %v836, %v1023
        %v1088 = vmul.f32 %v838, %v1024
        %v1089 = vmul.f32 %v949, %v1025
        %v1090 = vmul.f32 %v951, %v1026
        %v1091 = vmul.f32 %v842, %v1027
        %v1092 = vmul.f32 %v844, %v1028
        %v1093 = vmul.f32 %v955, %v1029
        %v1094 = vmul.f32 %v957, %v1030
        %v1095 = vmul.f32 %v846, %v1031
        %v1096 = vmul.f32 %v848, %v1032
        %v1097 = vmul.f32 %v959, %v1033
        %v1098 = vmul.f32 %v961, %v1034
        %v1099 = vmul.f32 %v852, %v1035
        %v1100 = vmul.f32 %v854, %v1036
        %v1101 = vmul.f32 %v965, %v1037
        %v1102 = vmul.f32 %v967, %v1038
        %v1103 = vmul.f32 %v856, %v1039
        %v1104 = vmul.f32 %v858, %v1040
        %v1105 = vmul.f32 %v969, %v1041
        %v1106 = vmul.f32 %v971, %v1042
        %v1107 = vmul.f32 %v862, %v1043
        %v1108 = vmul.f32 %v864, %v1044
        %v1109 = vmul.f32 %v975, %v1045
        %v1110 = vmul.f32 %v977, %v1046
        %v1111 = vmul.f32 %v866, %v1047
        %v1112 = vmul.f32 %v868, %v1048
        %v1113 = vmul.f32 %v979, %v1049
        %v1114 = vmul.f32 %v981, %v1050
        %v1115 = vmul.f32 %v872, %v1051
        %v1116 = vmul.f32 %v874, %v1052
        %v1117 = vmul.f32 %v985, %v1053
        %v1118 = vmul.f32 %v987, %v1054
        %v1119 = vmul.f32 %v876, %v1055
        %v1120 = vmul.f32 %v878, %v1056
        %v1121 = vmul.f32 %v989, %v1057
        %v1122 = vmul.f32 %v991, %v1058
        %v1123 = vmul.f32 %v882, %v1059
        %v1124 = vmul.f32 %v884, %v1060
        %v1125 = vmul.f32 %v995, %v1061
        %v1126 = vmul.f32 %v997, %v1062
        %v1127 = vmul.f32 %v886, %v1063
        %v1128 = vmul.f32 %v888, %v1064
        %v1129 = vmul.f32 %v999, %v1065
        %v1130 = vmul.f32 %v1001, %v1066
        %v1131 = vmul.f32 %v1067, 0.044715
        %v1132 = vmul.f32 %v1068, 0.044715
        %v1133 = vmul.f32 %v1069, 0.044715
        %v1134 = vmul.f32 %v1070, 0.044715
        %v1135 = vmul.f32 %v1071, 0.044715
        %v1136 = vmul.f32 %v1072, 0.044715
        %v1137 = vmul.f32 %v1073, 0.044715
        %v1138 = vmul.f32 %v1074, 0.044715
        %v1139 = vmul.f32 %v1075, 0.044715
        %v1140 = vmul.f32 %v1076, 0.044715
        %v1141 = vmul.f32 %v1077, 0.044715
        %v1142 = vmul.f32 %v1078, 0.044715
        %v1143 = vmul.f32 %v1079, 0.044715
        %v1144 = vmul.f32 %v1080, 0.044715
        %v1145 = vmul.f32 %v1081, 0.044715
        %v1146 = vmul.f32 %v1082, 0.044715
        %v1147 = vmul.f32 %v1083, 0.044715
        %v1148 = vmul.f32 %v1084, 0.044715
        %v1149 = vmul.f32 %v1085, 0.044715
        %v1150 = vmul.f32 %v1086, 0.044715
        %v1151 = vmul.f32 %v1087, 0.044715
        %v1152 = vmul.f32 %v1088, 0.044715
        %v1153 = vmul.f32 %v1089, 0.044715
        %v1154 = vmul.f32 %v1090, 0.044715
        %v1155 = vmul.f32 %v1091, 0.044715
        %v1156 = vmul.f32 %v1092, 0.044715
        %v1157 = vmul.f32 %v1093, 0.044715
        %v1158 = vmul.f32 %v1094, 0.044715
        %v1159 = vmul.f32 %v1095, 0.044715
        %v1160 = vmul.f32 %v1096, 0.044715
        %v1161 = vmul.f32 %v1097, 0.044715
        %v1162 = vmul.f32 %v1098, 0.044715
        %v1163 = vmul.f32 %v1099, 0.044715
        %v1164 = vmul.f32 %v1100, 0.044715
        %v1165 = vmul.f32 %v1101, 0.044715
        %v1166 = vmul.f32 %v1102, 0.044715
        %v1167 = vmul.f32 %v1103, 0.044715
        %v1168 = vmul.f32 %v1104, 0.044715
        %v1169 = vmul.f32 %v1105, 0.044715
        %v1170 = vmul.f32 %v1106, 0.044715
        %v1171 = vmul.f32 %v1107, 0.044715
        %v1172 = vmul.f32 %v1108, 0.044715
        %v1173 = vmul.f32 %v1109, 0.044715
        %v1174 = vmul.f32 %v1110, 0.044715
        %v1175 = vmul.f32 %v1111, 0.044715
        %v1176 = vmul.f32 %v1112, 0.044715
        %v1177 = vmul.f32 %v1113, 0.044715
        %v1178 = vmul.f32 %v1114, 0.044715
        %v1179 = vmul.f32 %v1115, 0.044715
        %v1180 = vmul.f32 %v1116, 0.044715
        %v1181 = vmul.f32 %v1117, 0.044715
        %v1182 = vmul.f32 %v1118, 0.044715
        %v1183 = vmul.f32 %v1119, 0.044715
        %v1184 = vmul.f32 %v1120, 0.044715
        %v1185 = vmul.f32 %v1121, 0.044715
        %v1186 = vmul.f32 %v1122, 0.044715
        %v1187 = vmul.f32 %v1123, 0.044715
        %v1188 = vmul.f32 %v1124, 0.044715
        %v1189 = vmul.f32 %v1125, 0.044715
        %v1190 = vmul.f32 %v1126, 0.044715
        %v1191 = vmul.f32 %v1127, 0.044715
        %v1192 = vmul.f32 %v1128, 0.044715
        %v1193 = vmul.f32 %v1129, 0.044715
        %v1194 = vmul.f32 %v1130, 0.044715
        %v1195 = vadd.f32 %v812, %v1131
        %v1196 = vadd.f32 %v814, %v1132
        %v1197 = vadd.f32 %v925, %v1133
        %v1198 = vadd.f32 %v927, %v1134
        %v1199 = vadd.f32 %v816, %v1135
        %v1200 = vadd.f32 %v818, %v1136
        %v1201 = vadd.f32 %v929, %v1137
        %v1202 = vadd.f32 %v931, %v1138
        %v1203 = vadd.f32 %v822, %v1139
        %v1204 = vadd.f32 %v824, %v1140
        %v1205 = vadd.f32 %v935, %v1141
        %v1206 = vadd.f32 %v937, %v1142
        %v1207 = vadd.f32 %v826, %v1143
        %v1208 = vadd.f32 %v828, %v1144
        %v1209 = vadd.f32 %v939, %v1145
        %v1210 = vadd.f32 %v941, %v1146
        %v1211 = vadd.f32 %v832, %v1147
        %v1212 = vadd.f32 %v834, %v1148
        %v1213 = vadd.f32 %v945, %v1149
        %v1214 = vadd.f32 %v947, %v1150
        %v1215 = vadd.f32 %v836, %v1151
        %v1216 = vadd.f32 %v838, %v1152
        %v1217 = vadd.f32 %v949, %v1153
        %v1218 = vadd.f32 %v951, %v1154
        %v1219 = vadd.f32 %v842, %v1155
        %v1220 = vadd.f32 %v844, %v1156
        %v1221 = vadd.f32 %v955, %v1157
        %v1222 = vadd.f32 %v957, %v1158
        %v1223 = vadd.f32 %v846, %v1159
        %v1224 = vadd.f32 %v848, %v1160
        %v1225 = vadd.f32 %v959, %v1161
        %v1226 = vadd.f32 %v961, %v1162
        %v1227 = vadd.f32 %v852, %v1163
        %v1228 = vadd.f32 %v854, %v1164
        %v1229 = vadd.f32 %v965, %v1165
        %v1230 = vadd.f32 %v967, %v1166
        %v1231 = vadd.f32 %v856, %v1167
        %v1232 = vadd.f32 %v858, %v1168
        %v1233 = vadd.f32 %v969, %v1169
        %v1234 = vadd.f32 %v971, %v1170
        %v1235 = vadd.f32 %v862, %v1171
        %v1236 = vadd.f32 %v864, %v1172
        %v1237 = vadd.f32 %v975, %v1173
        %v1238 = vadd.f32 %v977, %v1174
        %v1239 = vadd.f32 %v866, %v1175
        %v1240 = vadd.f32 %v868, %v1176
        %v1241 = vadd.f32 %v979, %v1177
        %v1242 = vadd.f32 %v981, %v1178
        %v1243 = vadd.f32 %v872, %v1179
        %v1244 = vadd.f32 %v874, %v1180
        %v1245 = vadd.f32 %v985, %v1181
        %v1246 = vadd.f32 %v987, %v1182
        %v1247 = vadd.f32 %v876, %v1183
        %v1248 = vadd.f32 %v878, %v1184
        %v1249 = vadd.f32 %v989, %v1185
        %v1250 = vadd.f32 %v991, %v1186
        %v1251 = vadd.f32 %v882, %v1187
        %v1252 = vadd.f32 %v884, %v1188
        %v1253 = vadd.f32 %v995, %v1189
        %v1254 = vadd.f32 %v997, %v1190
        %v1255 = vadd.f32 %v886, %v1191
        %v1256 = vadd.f32 %v888, %v1192
        %v1257 = vadd.f32 %v999, %v1193
        %v1258 = vadd.f32 %v1001, %v1194
        %v1259 = vmul.f32 %v1195, 0.7978846
        %v1260 = vmul.f32 %v1196, 0.7978846
        %v1261 = vmul.f32 %v1197, 0.7978846
        %v1262 = vmul.f32 %v1198, 0.7978846
        %v1263 = vmul.f32 %v1199, 0.7978846
        %v1264 = vmul.f32 %v1200, 0.7978846
        %v1265 = vmul.f32 %v1201, 0.7978846
        %v1266 = vmul.f32 %v1202, 0.7978846
        %v1267 = vmul.f32 %v1203, 0.7978846
        %v1268 = vmul.f32 %v1204, 0.7978846
        %v1269 = vmul.f32 %v1205, 0.7978846
        %v1270 = vmul.f32 %v1206, 0.7978846
        %v1271 = vmul.f32 %v1207, 0.7978846
        %v1272 = vmul.f32 %v1208, 0.7978846
        %v1273 = vmul.f32 %v1209, 0.7978846
        %v1274 = vmul.f32 %v1210, 0.7978846
        %v1275 = vmul.f32 %v1211, 0.7978846
        %v1276 = vmul.f32 %v1212, 0.7978846
        %v1277 = vmul.f32 %v1213, 0.7978846
        %v1278 = vmul.f32 %v1214, 0.7978846
        %v1279 = vmul.f32 %v1215, 0.7978846
        %v1280 = vmul.f32 %v1216, 0.7978846
        %v1281 = vmul.f32 %v1217, 0.7978846
        %v1282 = vmul.f32 %v1218, 0.7978846
        %v1283 = vmul.f32 %v1219, 0.7978846
        %v1284 = vmul.f32 %v1220, 0.7978846
        %v1285 = vmul.f32 %v1221, 0.7978846
        %v1286 = vmul.f32 %v1222, 0.7978846
        %v1287 = vmul.f32 %v1223, 0.7978846
        %v1288 = vmul.f32 %v1224, 0.7978846
        %v1289 = vmul.f32 %v1225, 0.7978846
        %v1290 = vmul.f32 %v1226, 0.7978846
        %v1291 = vmul.f32 %v1227, 0.7978846
        %v1292 = vmul.f32 %v1228, 0.7978846
        %v1293 = vmul.f32 %v1229, 0.7978846
        %v1294 = vmul.f32 %v1230, 0.7978846
        %v1295 = vmul.f32 %v1231, 0.7978846
        %v1296 = vmul.f32 %v1232, 0.7978846
        %v1297 = vmul.f32 %v1233, 0.7978846
        %v1298 = vmul.f32 %v1234, 0.7978846
        %v1299 = vmul.f32 %v1235, 0.7978846
        %v1300 = vmul.f32 %v1236, 0.7978846
        %v1301 = vmul.f32 %v1237, 0.7978846
        %v1302 = vmul.f32 %v1238, 0.7978846
        %v1303 = vmul.f32 %v1239, 0.7978846
        %v1304 = vmul.f32 %v1240, 0.7978846
        %v1305 = vmul.f32 %v1241, 0.7978846
        %v1306 = vmul.f32 %v1242, 0.7978846
        %v1307 = vmul.f32 %v1243, 0.7978846
        %v1308 = vmul.f32 %v1244, 0.7978846
        %v1309 = vmul.f32 %v1245, 0.7978846
        %v1310 = vmul.f32 %v1246, 0.7978846
        %v1311 = vmul.f32 %v1247, 0.7978846
        %v1312 = vmul.f32 %v1248, 0.7978846
        %v1313 = vmul.f32 %v1249, 0.7978846
        %v1314 = vmul.f32 %v1250, 0.7978846
        %v1315 = vmul.f32 %v1251, 0.7978846
        %v1316 = vmul.f32 %v1252, 0.7978846
        %v1317 = vmul.f32 %v1253, 0.7978846
        %v1318 = vmul.f32 %v1254, 0.7978846
        %v1319 = vmul.f32 %v1255, 0.7978846
        %v1320 = vmul.f32 %v1256, 0.7978846
        %v1321 = vmul.f32 %v1257, 0.7978846
        %v1322 = vmul.f32 %v1258, 0.7978846
        %v1323 = vtanh.pop %v1259
        %v1324 = vtanh.pop %v1260
        %v1325 = vtanh.pop %v1261
        %v1326 = vtanh.pop %v1262
        %v1327 = vtanh.pop %v1263
        %v1328 = vtanh.pop %v1264
        %v1329 = vtanh.pop %v1265
        %v1330 = vtanh.pop %v1266
        %v1331 = vtanh.pop %v1267
        %v1332 = vtanh.pop %v1268
        %v1333 = vtanh.pop %v1269
        %v1334 = vtanh.pop %v1270
        %v1335 = vtanh.pop %v1271
        %v1336 = vtanh.pop %v1272
        %v1337 = vtanh.pop %v1273
        %v1338 = vtanh.pop %v1274
        %v1339 = vtanh.pop %v1275
        %v1340 = vtanh.pop %v1276
        %v1341 = vtanh.pop %v1277
        %v1342 = vtanh.pop %v1278
        %v1343 = vtanh.pop %v1279
        %v1344 = vtanh.pop %v1280
        %v1345 = vtanh.pop %v1281
        %v1346 = vtanh.pop %v1282
        %v1347 = vtanh.pop %v1283
        %v1348 = vtanh.pop %v1284
        %v1349 = vtanh.pop %v1285
        %v1350 = vtanh.pop %v1286
        %v1351 = vtanh.pop %v1287
        %v1352 = vtanh.pop %v1288
        %v1353 = vtanh.pop %v1289
        %v1354 = vtanh.pop %v1290
        %v1355 = vtanh.pop %v1291
        %v1356 = vtanh.pop %v1292
        %v1357 = vtanh.pop %v1293
        %v1358 = vtanh.pop %v1294
        %v1359 = vtanh.pop %v1295
        %v1360 = vtanh.pop %v1296
        %v1361 = vtanh.pop %v1297
        %v1362 = vtanh.pop %v1298
        %v1363 = vtanh.pop %v1299
        %v1364 = vtanh.pop %v1300
        %v1365 = vtanh.pop %v1301
        %v1366 = vtanh.pop %v1302
        %v1367 = vtanh.pop %v1303
        %v1368 = vtanh.pop %v1304
        %v1369 = vtanh.pop %v1305
        %v1370 = vtanh.pop %v1306
        %v1371 = vtanh.pop %v1307
        %v1372 = vtanh.pop %v1308
        %v1373 = vtanh.pop %v1309
        %v1374 = vtanh.pop %v1310
        %v1375 = vtanh.pop %v1311
        %v1376 = vtanh.pop %v1312
        %v1377 = vtanh.pop %v1313
        %v1378 = vtanh.pop %v1314
        %v1379 = vtanh.pop %v1315
        %v1380 = vtanh.pop %v1316
        %v1381 = vtanh.pop %v1317
        %v1382 = vtanh.pop %v1318
        %v1383 = vtanh.pop %v1319
        %v1384 = vtanh.pop %v1320
        %v1385 = vtanh.pop %v1321
        %v1386 = vtanh.pop %v1322
        %v1387 = vadd.f32 %v1323, 1.0
        %v1388 = vadd.f32 %v1324, 1.0
        %v1389 = vadd.f32 %v1325, 1.0
        %v1390 = vadd.f32 %v1326, 1.0
        %v1391 = vadd.f32 %v1327, 1.0
        %v1392 = vadd.f32 %v1328, 1.0
        %v1393 = vadd.f32 %v1329, 1.0
        %v1394 = vadd.f32 %v1330, 1.0
        %v1395 = vadd.f32 %v1331, 1.0
        %v1396 = vadd.f32 %v1332, 1.0
        %v1397 = vadd.f32 %v1333, 1.0
        %v1398 = vadd.f32 %v1334, 1.0
        %v1399 = vadd.f32 %v1335, 1.0
        %v1400 = vadd.f32 %v1336, 1.0
        %v1401 = vadd.f32 %v1337, 1.0
        %v1402 = vadd.f32 %v1338, 1.0
        %v1403 = vadd.f32 %v1339, 1.0
        %v1404 = vadd.f32 %v1340, 1.0
        %v1405 = vadd.f32 %v1341, 1.0
        %v1406 = vadd.f32 %v1342, 1.0
        %v1407 = vadd.f32 %v1343, 1.0
        %v1408 = vadd.f32 %v1344, 1.0
        %v1409 = vadd.f32 %v1345, 1.0
        %v1410 = vadd.f32 %v1346, 1.0
        %v1411 = vadd.f32 %v1347, 1.0
        %v1412 = vadd.f32 %v1348, 1.0
        %v1413 = vadd.f32 %v1349, 1.0
        %v1414 = vadd.f32 %v1350, 1.0
        %v1415 = vadd.f32 %v1351, 1.0
        %v1416 = vadd.f32 %v1352, 1.0
        %v1417 = vadd.f32 %v1353, 1.0
        %v1418 = vadd.f32 %v1354, 1.0
        %v1419 = vadd.f32 %v1355, 1.0
        %v1420 = vadd.f32 %v1356, 1.0
        %v1421 = vadd.f32 %v1357, 1.0
        %v1422 = vadd.f32 %v1358, 1.0
        %v1423 = vadd.f32 %v1359, 1.0
        %v1424 = vadd.f32 %v1360, 1.0
        %v1425 = vadd.f32 %v1361, 1.0
        %v1426 = vadd.f32 %v1362, 1.0
        %v1427 = vadd.f32 %v1363, 1.0
        %v1428 = vadd.f32 %v1364, 1.0
        %v1429 = vadd.f32 %v1365, 1.0
        %v1430 = vadd.f32 %v1366, 1.0
        %v1431 = vadd.f32 %v1367, 1.0
        %v1432 = vadd.f32 %v1368, 1.0
        %v1433 = vadd.f32 %v1369, 1.0
        %v1434 = vadd.f32 %v1370, 1.0
        %v1435 = vadd.f32 %v1371, 1.0
        %v1436 = vadd.f32 %v1372, 1.0
        %v1437 = vadd.f32 %v1373, 1.0
        %v1438 = vadd.f32 %v1374, 1.0
        %v1439 = vadd.f32 %v1375, 1.0
        %v1440 = vadd.f32 %v1376, 1.0
        %v1441 = vadd.f32 %v1377, 1.0
        %v1442 = vadd.f32 %v1378, 1.0
        %v1443 = vadd.f32 %v1379, 1.0
        %v1444 = vadd.f32 %v1380, 1.0
        %v1445 = vadd.f32 %v1381, 1.0
        %v1446 = vadd.f32 %v1382, 1.0
        %v1447 = vadd.f32 %v1383, 1.0
        %v1448 = vadd.f32 %v1384, 1.0
        %v1449 = vadd.f32 %v1385, 1.0
        %v1450 = vadd.f32 %v1386, 1.0
        %v1451 = vmul.f32 %v1387, 0.5
        %v1452 = vmul.f32 %v1388, 0.5
        %v1453 = vmul.f32 %v1389, 0.5
        %v1454 = vmul.f32 %v1390, 0.5
        %v1455 = vmul.f32 %v1391, 0.5
        %v1456 = vmul.f32 %v1392, 0.5
        %v1457 = vmul.f32 %v1393, 0.5
        %v1458 = vmul.f32 %v1394, 0.5
        %v1459 = vmul.f32 %v1395, 0.5
        %v1460 = vmul.f32 %v1396, 0.5
        %v1461 = vmul.f32 %v1397, 0.5
        %v1462 = vmul.f32 %v1398, 0.5
        %v1463 = vmul.f32 %v1399, 0.5
        %v1464 = vmul.f32 %v1400, 0.5
        %v1465 = vmul.f32 %v1401, 0.5
        %v1466 = vmul.f32 %v1402, 0.5
        %v1467 = vmul.f32 %v1403, 0.5
        %v1468 = vmul.f32 %v1404, 0.5
        %v1469 = vmul.f32 %v1405, 0.5
        %v1470 = vmul.f32 %v1406, 0.5
        %v1471 = vmul.f32 %v1407, 0.5
        %v1472 = vmul.f32 %v1408, 0.5
        %v1473 = vmul.f32 %v1409, 0.5
        %v1474 = vmul.f32 %v1410, 0.5
        %v1475 = vmul.f32 %v1411, 0.5
        %v1476 = vmul.f32 %v1412, 0.5
        %v1477 = vmul.f32 %v1413, 0.5
        %v1478 = vmul.f32 %v1414, 0.5
        %v1479 = vmul.f32 %v1415, 0.5
        %v1480 = vmul.f32 %v1416, 0.5
        %v1481 = vmul.f32 %v1417, 0.5
        %v1482 = vmul.f32 %v1418, 0.5
        %v1483 = vmul.f32 %v1419, 0.5
        %v1484 = vmul.f32 %v1420, 0.5
        %v1485 = vmul.f32 %v1421, 0.5
        %v1486 = vmul.f32 %v1422, 0.5
        %v1487 = vmul.f32 %v1423, 0.5
        %v1488 = vmul.f32 %v1424, 0.5
        %v1489 = vmul.f32 %v1425, 0.5
        %v1490 = vmul.f32 %v1426, 0.5
        %v1491 = vmul.f32 %v1427, 0.5
        %v1492 = vmul.f32 %v1428, 0.5
        %v1493 = vmul.f32 %v1429, 0.5
        %v1494 = vmul.f32 %v1430, 0.5
        %v1495 = vmul.f32 %v1431, 0.5
        %v1496 = vmul.f32 %v1432, 0.5
        %v1497 = vmul.f32 %v1433, 0.5
        %v1498 = vmul.f32 %v1434, 0.5
        %v1499 = vmul.f32 %v1435, 0.5
        %v1500 = vmul.f32 %v1436, 0.5
        %v1501 = vmul.f32 %v1437, 0.5
        %v1502 = vmul.f32 %v1438, 0.5
        %v1503 = vmul.f32 %v1439, 0.5
        %v1504 = vmul.f32 %v1440, 0.5
        %v1505 = vmul.f32 %v1441, 0.5
        %v1506 = vmul.f32 %v1442, 0.5
        %v1507 = vmul.f32 %v1443, 0.5
        %v1508 = vmul.f32 %v1444, 0.5
        %v1509 = vmul.f32 %v1445, 0.5
        %v1510 = vmul.f32 %v1446, 0.5
        %v1511 = vmul.f32 %v1447, 0.5
        %v1512 = vmul.f32 %v1448, 0.5
        %v1513 = vmul.f32 %v1449, 0.5
        %v1514 = vmul.f32 %v1450, 0.5
        %v1515 = vmul.f32 %v812, %v1451
        %v1516 = vmul.f32 %v814, %v1452
        %v1517 = vmul.f32 %v925, %v1453
        %v1518 = vmul.f32 %v927, %v1454
        %v1519 = vmul.f32 %v816, %v1455
        %v1520 = vmul.f32 %v818, %v1456
        %v1521 = vmul.f32 %v929, %v1457
        %v1522 = vmul.f32 %v931, %v1458
        %v1523 = vmul.f32 %v822, %v1459
        %v1524 = vmul.f32 %v824, %v1460
        %v1525 = vmul.f32 %v935, %v1461
        %v1526 = vmul.f32 %v937, %v1462
        %v1527 = vmul.f32 %v826, %v1463
        %v1528 = vmul.f32 %v828, %v1464
        %v1529 = vmul.f32 %v939, %v1465
        %v1530 = vmul.f32 %v941, %v1466
        %v1531 = vmul.f32 %v832, %v1467
        %v1532 = vmul.f32 %v834, %v1468
        %v1533 = vmul.f32 %v945, %v1469
        %v1534 = vmul.f32 %v947, %v1470
        %v1535 = vmul.f32 %v836, %v1471
        %v1536 = vmul.f32 %v838, %v1472
        %v1537 = vmul.f32 %v949, %v1473
        %v1538 = vmul.f32 %v951, %v1474
        %v1539 = vmul.f32 %v842, %v1475
        %v1540 = vmul.f32 %v844, %v1476
        %v1541 = vmul.f32 %v955, %v1477
        %v1542 = vmul.f32 %v957, %v1478
        %v1543 = vmul.f32 %v846, %v1479
        %v1544 = vmul.f32 %v848, %v1480
        %v1545 = vmul.f32 %v959, %v1481
        %v1546 = vmul.f32 %v961, %v1482
        %v1547 = vmul.f32 %v852, %v1483
        %v1548 = vmul.f32 %v854, %v1484
        %v1549 = vmul.f32 %v965, %v1485
        %v1550 = vmul.f32 %v967, %v1486
        %v1551 = vmul.f32 %v856, %v1487
        %v1552 = vmul.f32 %v858, %v1488
        %v1553 = vmul.f32 %v969, %v1489
        %v1554 = vmul.f32 %v971, %v1490
        %v1555 = vmul.f32 %v862, %v1491
        %v1556 = vmul.f32 %v864, %v1492
        %v1557 = vmul.f32 %v975, %v1493
        %v1558 = vmul.f32 %v977, %v1494
        %v1559 = vmul.f32 %v866, %v1495
        %v1560 = vmul.f32 %v868, %v1496
        %v1561 = vmul.f32 %v979, %v1497
        %v1562 = vmul.f32 %v981, %v1498
        %v1563 = vmul.f32 %v872, %v1499
        %v1564 = vmul.f32 %v874, %v1500
        %v1565 = vmul.f32 %v985, %v1501
        %v1566 = vmul.f32 %v987, %v1502
        %v1567 = vmul.f32 %v876, %v1503
        %v1568 = vmul.f32 %v878, %v1504
        %v1569 = vmul.f32 %v989, %v1505
        %v1570 = vmul.f32 %v991, %v1506
        %v1571 = vmul.f32 %v882, %v1507
        %v1572 = vmul.f32 %v884, %v1508
        %v1573 = vmul.f32 %v995, %v1509
        %v1574 = vmul.f32 %v997, %v1510
        %v1575 = vmul.f32 %v886, %v1511
        %v1576 = vmul.f32 %v888, %v1512
        %v1577 = vmul.f32 %v999, %v1513
        %v1578 = vmul.f32 %v1001, %v1514
        %v1579 = vpack.c.bf16 %v1519, %v1515
        %v1580 = vpack.c.bf16 %v1520, %v1516
        %v1581 = vpack.c.bf16 %v1521, %v1517
        %v1582 = vpack.c.bf16 %v1522, %v1518
        %v1583 = vpack.c.bf16 %v1527, %v1523
        %v1584 = vpack.c.bf16 %v1528, %v1524
        %v1585 = vpack.c.bf16 %v1529, %v1525
        %v1586 = vpack.c.bf16 %v1530, %v1526
        %v1587 = vpack.c.bf16 %v1535, %v1531
        %v1588 = vpack.c.bf16 %v1536, %v1532
        %v1589 = vpack.c.bf16 %v1537, %v1533
        %v1590 = vpack.c.bf16 %v1538, %v1534
        %v1591 = vpack.c.bf16 %v1543, %v1539
        %v1592 = vpack.c.bf16 %v1544, %v1540
        %v1593 = vpack.c.bf16 %v1545, %v1541
        %v1594 = vpack.c.bf16 %v1546, %v1542
        %v1595 = vpack.c.bf16 %v1551, %v1547
        %v1596 = vpack.c.bf16 %v1552, %v1548
        %v1597 = vpack.c.bf16 %v1553, %v1549
        %v1598 = vpack.c.bf16 %v1554, %v1550
        %v1599 = vpack.c.bf16 %v1559, %v1555
        %v1600 = vpack.c.bf16 %v1560, %v1556
        %v1601 = vpack.c.bf16 %v1561, %v1557
        %v1602 = vpack.c.bf16 %v1562, %v1558
        %v1603 = vpack.c.bf16 %v1567, %v1563
        %v1604 = vpack.c.bf16 %v1568, %v1564
        %v1605 = vpack.c.bf16 %v1569, %v1565
        %v1606 = vpack.c.bf16 %v1570, %v1566
        %v1607 = vpack.c.bf16 %v1575, %v1571
        %v1608 = vpack.c.bf16 %v1576, %v1572
        %v1609 = vpack.c.bf16 %v1577, %v1573
        %v1610 = vpack.c.bf16 %v1578, %v1574
        %v1611 = vld [vmem:[#allocation7] sm:$0xff]
        %v1612 = vld [vmem:[#allocation7 + $0x8] sm:$0xff]
        %v1613 = vld [vmem:[#allocation7 + $0x10] sm:$0xff]
        %v1614 = vld [vmem:[#allocation7 + $0x18] sm:$0xff]
        %v1615 = vld [vmem:[#allocation7 + $0x20] sm:$0xff]
        %v1616 = vld [vmem:[#allocation7 + $0x28] sm:$0xff]
        %v1617 = vld [vmem:[#allocation7 + $0x30] sm:$0xff]
        %v1618 = vld [vmem:[#allocation7 + $0x38] sm:$0xff]
        %v1619 = vld [vmem:[#allocation7 + $0x40] sm:$0xff]
        %v1620 = vld [vmem:[#allocation7 + $0x48] sm:$0xff]
        %v1621 = vld [vmem:[#allocation7 + $0x50] sm:$0xff]
        %v1622 = vld [vmem:[#allocation7 + $0x58] sm:$0xff]
        %v1623 = vld [vmem:[#allocation7 + $0x60] sm:$0xff]
        %v1624 = vld [vmem:[#allocation7 + $0x68] sm:$0xff]
        %v1625 = vld [vmem:[#allocation7 + $0x70] sm:$0xff]
        %v1626 = vld [vmem:[#allocation7 + $0x78] sm:$0xff]
        %v1627 = vld [vmem:[#allocation7 + $0x80] sm:$0xff]
        %v1628 = vld [vmem:[#allocation7 + $0x88] sm:$0xff]
        %v1629 = vld [vmem:[#allocation7 + $0x90] sm:$0xff]
        %v1630 = vld [vmem:[#allocation7 + $0x98] sm:$0xff]
        %v1631 = vld [vmem:[#allocation7 + $0xa0] sm:$0xff]
        %v1632 = vld [vmem:[#allocation7 + $0xa8] sm:$0xff]
        %v1633 = vld [vmem:[#allocation7 + $0xb0] sm:$0xff]
        %v1634 = vld [vmem:[#allocation7 + $0xb8] sm:$0xff]
        %v1635 = vld [vmem:[#allocation7 + $0xc0] sm:$0xff]
        %v1636 = vld [vmem:[#allocation7 + $0xc8] sm:$0xff]
        %v1637 = vld [vmem:[#allocation7 + $0xd0] sm:$0xff]
        %v1638 = vld [vmem:[#allocation7 + $0xd8] sm:$0xff]
        %v1639 = vld [vmem:[#allocation7 + $0xe0] sm:$0xff]
        %v1640 = vld [vmem:[#allocation7 + $0xe8] sm:$0xff]
        %v1641 = vld [vmem:[#allocation7 + $0xf0] sm:$0xff]
        %v1642 = vld [vmem:[#allocation7 + $0xf8] sm:$0xff]
        %v1643 = vld [vmem:[#allocation7 + $0x100] sm:$0xff]
        %v1644 = vld [vmem:[#allocation7 + $0x108] sm:$0xff]
        %v1645 = vld [vmem:[#allocation7 + $0x110] sm:$0xff]
        %v1646 = vld [vmem:[#allocation7 + $0x118] sm:$0xff]
        %v1647 = vld [vmem:[#allocation7 + $0x120] sm:$0xff]
        %v1648 = vld [vmem:[#allocation7 + $0x128] sm:$0xff]
        %v1649 = vld [vmem:[#allocation7 + $0x130] sm:$0xff]
        %v1650 = vld [vmem:[#allocation7 + $0x138] sm:$0xff]
        %v1651 = vld [vmem:[#allocation7 + $0x140] sm:$0xff]
        %v1652 = vld [vmem:[#allocation7 + $0x148] sm:$0xff]
        %v1653 = vld [vmem:[#allocation7 + $0x150] sm:$0xff]
        %v1654 = vld [vmem:[#allocation7 + $0x158] sm:$0xff]
        %v1655 = vld [vmem:[#allocation7 + $0x160] sm:$0xff]
        %v1656 = vld [vmem:[#allocation7 + $0x168] sm:$0xff]
        %v1657 = vld [vmem:[#allocation7 + $0x170] sm:$0xff]
        %v1658 = vld [vmem:[#allocation7 + $0x178] sm:$0xff]
        %v1659 = vld [vmem:[#allocation7 + $0x180] sm:$0xff]
        %v1660 = vld [vmem:[#allocation7 + $0x188] sm:$0xff]
        %v1661 = vld [vmem:[#allocation7 + $0x190] sm:$0xff]
        %v1662 = vld [vmem:[#allocation7 + $0x198] sm:$0xff]
        %v1663 = vld [vmem:[#allocation7 + $0x1a0] sm:$0xff]
        %v1664 = vld [vmem:[#allocation7 + $0x1a8] sm:$0xff]
        %v1665 = vld [vmem:[#allocation7 + $0x1b0] sm:$0xff]
        %v1666 = vld [vmem:[#allocation7 + $0x1b8] sm:$0xff]
        %v1667 = vld [vmem:[#allocation7 + $0x1c0] sm:$0xff]
        %v1668 = vld [vmem:[#allocation7 + $0x1c8] sm:$0xff]
        %v1669 = vld [vmem:[#allocation7 + $0x1d0] sm:$0xff]
        %v1670 = vld [vmem:[#allocation7 + $0x1d8] sm:$0xff]
        %v1671 = vld [vmem:[#allocation7 + $0x1e0] sm:$0xff]
        %v1672 = vld [vmem:[#allocation7 + $0x1e8] sm:$0xff]
        %v1673 = vld [vmem:[#allocation7 + $0x1f0] sm:$0xff]
        %v1674 = vld [vmem:[#allocation7 + $0x1f8] sm:$0xff]
        %v1675 = vld [vmem:[%s4] sm:$0x3]
        %v1677 = vlaneseq
        %v1678 = vshrl.u32 %v1677, 7
        %v1679 = vsub.s32 0, %v1678
        %v1680 = vrot.slane %v1675, %v1679
        %v1681 = vlaneseq
        %v1682 = vshrl.u32 %v1681, 7
        %v1683 = vsub.s32 1, %v1682
        %v1684 = vrot.slane %v1675, %v1683
        %v1751 = vunpack.c.l.b16 %v1611
        %v1752 = vunpack.c.h.b16 %v1611
        %v1753 = vunpack.c.l.b16 %v1612
        %v1754 = vunpack.c.h.b16 %v1612
        %v1755 = vunpack.c.l.b16 %v1613
        %v1756 = vunpack.c.h.b16 %v1613
        %v1757 = vunpack.c.l.b16 %v1614
        %v1758 = vunpack.c.h.b16 %v1614
        %v1759 = vunpack.c.l.b16 %v1615
        %v1760 = vunpack.c.h.b16 %v1615
        %v1761 = vunpack.c.l.b16 %v1616
        %v1762 = vunpack.c.h.b16 %v1616
        %v1763 = vunpack.c.l.b16 %v1617
        %v1764 = vunpack.c.h.b16 %v1617
        %v1765 = vunpack.c.l.b16 %v1618
        %v1766 = vunpack.c.h.b16 %v1618
        %v1767 = vunpack.c.l.b16 %v1619
        %v1768 = vunpack.c.h.b16 %v1619
        %v1769 = vunpack.c.l.b16 %v1620
        %v1770 = vunpack.c.h.b16 %v1620
        %v1771 = vunpack.c.l.b16 %v1621
        %v1772 = vunpack.c.h.b16 %v1621
        %v1773 = vunpack.c.l.b16 %v1622
        %v1774 = vunpack.c.h.b16 %v1622
        %v1775 = vunpack.c.l.b16 %v1623
        %v1776 = vunpack.c.h.b16 %v1623
        %v1777 = vunpack.c.l.b16 %v1624
        %v1778 = vunpack.c.h.b16 %v1624
        %v1779 = vunpack.c.l.b16 %v1625
        %v1780 = vunpack.c.h.b16 %v1625
        %v1781 = vunpack.c.l.b16 %v1626
        %v1782 = vunpack.c.h.b16 %v1626
        %v1783 = vunpack.c.l.b16 %v1627
        %v1784 = vunpack.c.h.b16 %v1627
        %v1785 = vunpack.c.l.b16 %v1628
        %v1786 = vunpack.c.h.b16 %v1628
        %v1787 = vunpack.c.l.b16 %v1629
        %v1788 = vunpack.c.h.b16 %v1629
        %v1789 = vunpack.c.l.b16 %v1630
        %v1790 = vunpack.c.h.b16 %v1630
        %v1791 = vunpack.c.l.b16 %v1631
        %v1792 = vunpack.c.h.b16 %v1631
        %v1793 = vunpack.c.l.b16 %v1632
        %v1794 = vunpack.c.h.b16 %v1632
        %v1795 = vunpack.c.l.b16 %v1633
        %v1796 = vunpack.c.h.b16 %v1633
        %v1797 = vunpack.c.l.b16 %v1634
        %v1798 = vunpack.c.h.b16 %v1634
        %v1799 = vunpack.c.l.b16 %v1635
        %v1800 = vunpack.c.h.b16 %v1635
        %v1801 = vunpack.c.l.b16 %v1636
        %v1802 = vunpack.c.h.b16 %v1636
        %v1803 = vunpack.c.l.b16 %v1637
        %v1804 = vunpack.c.h.b16 %v1637
        %v1805 = vunpack.c.l.b16 %v1638
        %v1806 = vunpack.c.h.b16 %v1638
        %v1807 = vunpack.c.l.b16 %v1639
        %v1808 = vunpack.c.h.b16 %v1639
        %v1809 = vunpack.c.l.b16 %v1640
        %v1810 = vunpack.c.h.b16 %v1640
        %v1811 = vunpack.c.l.b16 %v1641
        %v1812 = vunpack.c.h.b16 %v1641
        %v1813 = vunpack.c.l.b16 %v1642
        %v1814 = vunpack.c.h.b16 %v1642
        %v1815 = vunpack.c.l.b16 %v1643
        %v1816 = vunpack.c.h.b16 %v1643
        %v1817 = vunpack.c.l.b16 %v1644
        %v1818 = vunpack.c.h.b16 %v1644
        %v1819 = vunpack.c.l.b16 %v1645
        %v1820 = vunpack.c.h.b16 %v1645
        %v1821 = vunpack.c.l.b16 %v1646
        %v1822 = vunpack.c.h.b16 %v1646
        %v1823 = vunpack.c.l.b16 %v1647
        %v1824 = vunpack.c.h.b16 %v1647
        %v1825 = vunpack.c.l.b16 %v1648
        %v1826 = vunpack.c.h.b16 %v1648
        %v1827 = vunpack.c.l.b16 %v1649
        %v1828 = vunpack.c.h.b16 %v1649
        %v1829 = vunpack.c.l.b16 %v1650
        %v1830 = vunpack.c.h.b16 %v1650
        %v1831 = vunpack.c.l.b16 %v1651
        %v1832 = vunpack.c.h.b16 %v1651
        %v1833 = vunpack.c.l.b16 %v1652
        %v1834 = vunpack.c.h.b16 %v1652
        %v1835 = vunpack.c.l.b16 %v1653
        %v1836 = vunpack.c.h.b16 %v1653
        %v1837 = vunpack.c.l.b16 %v1654
        %v1838 = vunpack.c.h.b16 %v1654
        %v1839 = vunpack.c.l.b16 %v1655
        %v1840 = vunpack.c.h.b16 %v1655
        %v1841 = vunpack.c.l.b16 %v1656
        %v1842 = vunpack.c.h.b16 %v1656
        %v1843 = vunpack.c.l.b16 %v1657
        %v1844 = vunpack.c.h.b16 %v1657
        %v1845 = vunpack.c.l.b16 %v1658
        %v1846 = vunpack.c.h.b16 %v1658
        %v1847 = vunpack.c.l.b16 %v1659
        %v1848 = vunpack.c.h.b16 %v1659
        %v1849 = vunpack.c.l.b16 %v1660
        %v1850 = vunpack.c.h.b16 %v1660
        %v1851 = vunpack.c.l.b16 %v1661
        %v1852 = vunpack.c.h.b16 %v1661
        %v1853 = vunpack.c.l.b16 %v1662
        %v1854 = vunpack.c.h.b16 %v1662
        %v1855 = vunpack.c.l.b16 %v1663
        %v1856 = vunpack.c.h.b16 %v1663
        %v1857 = vunpack.c.l.b16 %v1664
        %v1858 = vunpack.c.h.b16 %v1664
        %v1859 = vunpack.c.l.b16 %v1665
        %v1860 = vunpack.c.h.b16 %v1665
        %v1861 = vunpack.c.l.b16 %v1666
        %v1862 = vunpack.c.h.b16 %v1666
        %v1863 = vunpack.c.l.b16 %v1667
        %v1864 = vunpack.c.h.b16 %v1667
        %v1865 = vunpack.c.l.b16 %v1668
        %v1866 = vunpack.c.h.b16 %v1668
        %v1867 = vunpack.c.l.b16 %v1669
        %v1868 = vunpack.c.h.b16 %v1669
        %v1869 = vunpack.c.l.b16 %v1670
        %v1870 = vunpack.c.h.b16 %v1670
        %v1871 = vunpack.c.l.b16 %v1671
        %v1872 = vunpack.c.h.b16 %v1671
        %v1873 = vunpack.c.l.b16 %v1672
        %v1874 = vunpack.c.h.b16 %v1672
        %v1875 = vunpack.c.l.b16 %v1673
        %v1876 = vunpack.c.h.b16 %v1673
        %v1877 = vunpack.c.l.b16 %v1674
        %v1878 = vunpack.c.h.b16 %v1674
        %v1879 = vpack.c.b16 %v1753, %v1751
        %v1880 = vpack.c.b16 %v1754, %v1752
        %v1881 = vpack.c.b16 %v1757, %v1755
        %v1882 = vpack.c.b16 %v1758, %v1756
        %v1883 = vpack.c.b16 %v1761, %v1759
        %v1884 = vpack.c.b16 %v1762, %v1760
        %v1885 = vpack.c.b16 %v1765, %v1763
        %v1886 = vpack.c.b16 %v1766, %v1764
        %v1887 = vpack.c.b16 %v1769, %v1767
        %v1888 = vpack.c.b16 %v1770, %v1768
        %v1889 = vpack.c.b16 %v1773, %v1771
        %v1890 = vpack.c.b16 %v1774, %v1772
        %v1891 = vpack.c.b16 %v1777, %v1775
        %v1892 = vpack.c.b16 %v1778, %v1776
        %v1893 = vpack.c.b16 %v1781, %v1779
        %v1894 = vpack.c.b16 %v1782, %v1780
        %v1895 = vpack.c.b16 %v1785, %v1783
        %v1896 = vpack.c.b16 %v1786, %v1784
        %v1897 = vpack.c.b16 %v1789, %v1787
        %v1898 = vpack.c.b16 %v1790, %v1788
        %v1899 = vpack.c.b16 %v1793, %v1791
        %v1900 = vpack.c.b16 %v1794, %v1792
        %v1901 = vpack.c.b16 %v1797, %v1795
        %v1902 = vpack.c.b16 %v1798, %v1796
        %v1903 = vpack.c.b16 %v1801, %v1799
        %v1904 = vpack.c.b16 %v1802, %v1800
        %v1905 = vpack.c.b16 %v1805, %v1803
        %v1906 = vpack.c.b16 %v1806, %v1804
        %v1907 = vpack.c.b16 %v1809, %v1807
        %v1908 = vpack.c.b16 %v1810, %v1808
        %v1909 = vpack.c.b16 %v1813, %v1811
        %v1910 = vpack.c.b16 %v1814, %v1812
        %v1911 = vpack.c.b16 %v1817, %v1815
        %v1912 = vpack.c.b16 %v1818, %v1816
        %v1913 = vpack.c.b16 %v1821, %v1819
        %v1914 = vpack.c.b16 %v1822, %v1820
        %v1915 = vpack.c.b16 %v1825, %v1823
        %v1916 = vpack.c.b16 %v1826, %v1824
        %v1917 = vpack.c.b16 %v1829, %v1827
        %v1918 = vpack.c.b16 %v1830, %v1828
        %v1919 = vpack.c.b16 %v1833, %v1831
        %v1920 = vpack.c.b16 %v1834, %v1832
        %v1921 = vpack.c.b16 %v1837, %v1835
        %v1922 = vpack.c.b16 %v1838, %v1836
        %v1923 = vpack.c.b16 %v1841, %v1839
        %v1924 = vpack.c.b16 %v1842, %v1840
        %v1925 = vpack.c.b16 %v1845, %v1843
        %v1926 = vpack.c.b16 %v1846, %v1844
        %v1927 = vpack.c.b16 %v1849, %v1847
        %v1928 = vpack.c.b16 %v1850, %v1848
        %v1929 = vpack.c.b16 %v1853, %v1851
        %v1930 = vpack.c.b16 %v1854, %v1852
        %v1931 = vpack.c.b16 %v1857, %v1855
        %v1932 = vpack.c.b16 %v1858, %v1856
        %v1933 = vpack.c.b16 %v1861, %v1859
        %v1934 = vpack.c.b16 %v1862, %v1860
        %v1935 = vpack.c.b16 %v1865, %v1863
        %v1936 = vpack.c.b16 %v1866, %v1864
        %v1937 = vpack.c.b16 %v1869, %v1867
        %v1938 = vpack.c.b16 %v1870, %v1868
        %v1939 = vpack.c.b16 %v1873, %v1871
        %v1940 = vpack.c.b16 %v1874, %v1872
        %v1941 = vpack.c.b16 %v1877, %v1875
        %v1942 = vpack.c.b16 %v1878, %v1876
        %2007 = vmatprep.subr.bf16.mxu0 %v1880
        %2008 = vmatpush1.bf16.msra.mxu0 %v1879
        %2009 = vmatprep.subr.bf16.mxu0 %v1882
        %2010 = vmatpush1.bf16.msra.mxu0 %v1881
        %2011 = vmatprep.subr.bf16.mxu0 %v1884
        %2012 = vmatpush1.bf16.msra.mxu0 %v1883
        %2013 = vmatprep.subr.bf16.mxu0 %v1886
        %2014 = vmatpush1.bf16.msra.mxu0 %v1885
        %2015 = vmatprep.subr.bf16.mxu0 %v1888
        %2016 = vmatpush1.bf16.msra.mxu0 %v1887
        %2017 = vmatprep.subr.bf16.mxu0 %v1890
        %2018 = vmatpush1.bf16.msra.mxu0 %v1889
        %2019 = vmatprep.subr.bf16.mxu0 %v1892
        %2020 = vmatpush1.bf16.msra.mxu0 %v1891
        %2021 = vmatprep.subr.bf16.mxu0 %v1894
        %2022 = vmatpush1.bf16.msra.mxu0 %v1893
        %2023 = vmatprep.subr.bf16.mxu0 %v1896
        %2024 = vmatpush1.bf16.msra.mxu0 %v1895
        %2025 = vmatprep.subr.bf16.mxu0 %v1898
        %2026 = vmatpush1.bf16.msra.mxu0 %v1897
        %2027 = vmatprep.subr.bf16.mxu0 %v1900
        %2028 = vmatpush1.bf16.msra.mxu0 %v1899
        %2029 = vmatprep.subr.bf16.mxu0 %v1902
        %2030 = vmatpush1.bf16.msra.mxu0 %v1901
        %2031 = vmatprep.subr.bf16.mxu0 %v1904
        %2032 = vmatpush1.bf16.msra.mxu0 %v1903
        %2033 = vmatprep.subr.bf16.mxu0 %v1906
        %2034 = vmatpush1.bf16.msra.mxu0 %v1905
        %2035 = vmatprep.subr.bf16.mxu0 %v1908
        %2036 = vmatpush1.bf16.msra.mxu0 %v1907
        %2037 = vmatprep.subr.bf16.mxu0 %v1910
        %2038 = vmatpush1.bf16.msra.mxu0 %v1909
        %2039 = vmatprep.mubr.bf16.mxu0 %v1580
        %2040 = vmatmul.mubr.bf16.gmra.mrb[0].mxu0 %v1579
        %v2041 = vpop.f32.mrb[0].mxu0
        %v2042 = vadd.f32 %v1680, %v2041
        %v2043 = vpop.f32.mrb[0].mxu0
        %v2044 = vadd.f32 %v1684, %v2043
        %v2045 = vpop.f32.mrb[0].mxu0
        %v2046 = vadd.f32 %v1680, %v2045
        %v2047 = vpop.f32.mrb[0].mxu0
        %v2048 = vadd.f32 %v1684, %v2047
        %2049 = vmatprep.mubr.bf16.mxu0 %v1584
        %2050 = vmatmul.mubr.bf16.gmra.mrb[0].mxu0 %v1583
        %v2051 = vpop.f32.mrb[0].mxu0
        %v2052 = vadd.f32 %v1680, %v2051
        %v2053 = vpop.f32.mrb[0].mxu0
        %v2054 = vadd.f32 %v1684, %v2053
        %v2055 = vpop.f32.mrb[0].mxu0
        %v2056 = vadd.f32 %v1680, %v2055
        %v2057 = vpop.f32.mrb[0].mxu0
        %v2058 = vadd.f32 %v1684, %v2057
        %2059 = vmatprep.mubr.bf16.mxu0 %v1588
        %2060 = vmatmul.mubr.bf16.gmra.mrb[0].mxu0 %v1587
        %v2061 = vpop.f32.mrb[0].mxu0
        %v2062 = vadd.f32 %v1680, %v2061
        %v2063 = vpop.f32.mrb[0].mxu0
        %v2064 = vadd.f32 %v1684, %v2063
        %v2065 = vpop.f32.mrb[0].mxu0
        %v2066 = vadd.f32 %v1680, %v2065
        %v2067 = vpop.f32.mrb[0].mxu0
        %v2068 = vadd.f32 %v1684, %v2067
        %2069 = vmatprep.mubr.bf16.mxu0 %v1592
        %2070 = vmatmul.mubr.bf16.gmra.mrb[0].mxu0 %v1591
        %v2071 = vpop.f32.mrb[0].mxu0
        %v2072 = vadd.f32 %v1680, %v2071
        %v2073 = vpop.f32.mrb[0].mxu0
        %v2074 = vadd.f32 %v1684, %v2073
        %v2075 = vpop.f32.mrb[0].mxu0
        %v2076 = vadd.f32 %v1680, %v2075
        %v2077 = vpop.f32.mrb[0].mxu0
        %v2078 = vadd.f32 %v1684, %v2077
        %2079 = vmatprep.mubr.bf16.mxu0 %v1596
        %2080 = vmatmul.mubr.bf16.gmra.mrb[0].mxu0 %v1595
        %v2081 = vpop.f32.mrb[0].mxu0
        %v2082 = vadd.f32 %v1680, %v2081
        %v2083 = vpop.f32.mrb[0].mxu0
        %v2084 = vadd.f32 %v1684, %v2083
        %v2085 = vpop.f32.mrb[0].mxu0
        %v2086 = vadd.f32 %v1680, %v2085
        %v2087 = vpop.f32.mrb[0].mxu0
        %v2088 = vadd.f32 %v1684, %v2087
        %2089 = vmatprep.mubr.bf16.mxu0 %v1600
        %2090 = vmatmul.mubr.bf16.gmra.mrb[0].mxu0 %v1599
        %v2091 = vpop.f32.mrb[0].mxu0
        %v2092 = vadd.f32 %v1680, %v2091
        %v2093 = vpop.f32.mrb[0].mxu0
        %v2094 = vadd.f32 %v1684, %v2093
        %v2095 = vpop.f32.mrb[0].mxu0
        %v2096 = vadd.f32 %v1680, %v2095
        %v2097 = vpop.f32.mrb[0].mxu0
        %v2098 = vadd.f32 %v1684, %v2097
        %2099 = vmatprep.mubr.bf16.mxu0 %v1604
        %2100 = vmatmul.mubr.bf16.gmra.mrb[0].mxu0 %v1603
        %v2101 = vpop.f32.mrb[0].mxu0
        %v2102 = vadd.f32 %v1680, %v2101
        %v2103 = vpop.f32.mrb[0].mxu0
        %v2104 = vadd.f32 %v1684, %v2103
        %v2105 = vpop.f32.mrb[0].mxu0
        %v2106 = vadd.f32 %v1680, %v2105
        %v2107 = vpop.f32.mrb[0].mxu0
        %v2108 = vadd.f32 %v1684, %v2107
        %2109 = vmatprep.mubr.bf16.mxu0 %v1608
        %2110 = vmatmul.mubr.bf16.gmra.mrb[0].mxu0 %v1607
        %v2111 = vpop.f32.mrb[0].mxu0
        %v2112 = vadd.f32 %v1680, %v2111
        %v2113 = vpop.f32.mrb[0].mxu0
        %v2114 = vadd.f32 %v1684, %v2113
        %v2115 = vpop.f32.mrb[0].mxu0
        %v2116 = vadd.f32 %v1680, %v2115
        %v2117 = vpop.f32.mrb[0].mxu0
        %v2118 = vadd.f32 %v1684, %v2117
        %2119 = vdwg.mxu0
        %2120 = vmatprep.subr.bf16.mxu0 %v1912
        %2121 = vmatpush1.bf16.msra.mxu0 %v1911
        %2122 = vmatprep.subr.bf16.mxu0 %v1914
        %2123 = vmatpush1.bf16.msra.mxu0 %v1913
        %2124 = vmatprep.subr.bf16.mxu0 %v1916
        %2125 = vmatpush1.bf16.msra.mxu0 %v1915
        %2126 = vmatprep.subr.bf16.mxu0 %v1918
        %2127 = vmatpush1.bf16.msra.mxu0 %v1917
        %2128 = vmatprep.subr.bf16.mxu0 %v1920
        %2129 = vmatpush1.bf16.msra.mxu0 %v1919
        %2130 = vmatprep.subr.bf16.mxu0 %v1922
        %2131 = vmatpush1.bf16.msra.mxu0 %v1921
        %2132 = vmatprep.subr.bf16.mxu0 %v1924
        %2133 = vmatpush1.bf16.msra.mxu0 %v1923
        %2134 = vmatprep.subr.bf16.mxu0 %v1926
        %2135 = vmatpush1.bf16.msra.mxu0 %v1925
        %2136 = vmatprep.subr.bf16.mxu0 %v1928
        %2137 = vmatpush1.bf16.msra.mxu0 %v1927
        %2138 = vmatprep.subr.bf16.mxu0 %v1930
        %2139 = vmatpush1.bf16.msra.mxu0 %v1929
        %2140 = vmatprep.subr.bf16.mxu0 %v1932
        %2141 = vmatpush1.bf16.msra.mxu0 %v1931
        %2142 = vmatprep.subr.bf16.mxu0 %v1934
        %2143 = vmatpush1.bf16.msra.mxu0 %v1933
        %2144 = vmatprep.subr.bf16.mxu0 %v1936
        %2145 = vmatpush1.bf16.msra.mxu0 %v1935
        %2146 = vmatprep.subr.bf16.mxu0 %v1938
        %2147 = vmatpush1.bf16.msra.mxu0 %v1937
        %2148 = vmatprep.subr.bf16.mxu0 %v1940
        %2149 = vmatpush1.bf16.msra.mxu0 %v1939
        %2150 = vmatprep.subr.bf16.mxu0 %v1942
        %2151 = vmatpush1.bf16.msra.mxu0 %v1941
        %2152 = vmatprep.mubr.bf16.mxu0 %v1582
        %2153 = vmatmul.mubr.bf16.gmra.mrb[0].mxu0 %v1581
        %v2154 = vpop.f32.mrb[0].mxu0
        %v2155 = vadd.f32 %v2042, %v2154
        %v2156 = vpop.f32.mrb[0].mxu0
        %v2157 = vadd.f32 %v2044, %v2156
        %v2158 = vpop.f32.mrb[0].mxu0
        %v2159 = vadd.f32 %v2046, %v2158
        %v2160 = vpop.f32.mrb[0].mxu0
        %v2161 = vadd.f32 %v2048, %v2160
        %2162 = vmatprep.mubr.bf16.mxu0 %v1586
        %2163 = vmatmul.mubr.bf16.gmra.mrb[0].mxu0 %v1585
        %v2164 = vpop.f32.mrb[0].mxu0
        %v2165 = vadd.f32 %v2052, %v2164
        %v2166 = vpop.f32.mrb[0].mxu0
        %v2167 = vadd.f32 %v2054, %v2166
        %v2168 = vpop.f32.mrb[0].mxu0
        %v2169 = vadd.f32 %v2056, %v2168
        %v2170 = vpop.f32.mrb[0].mxu0
        %v2171 = vadd.f32 %v2058, %v2170
        %2172 = vmatprep.mubr.bf16.mxu0 %v1590
        %2173 = vmatmul.mubr.bf16.gmra.mrb[0].mxu0 %v1589
        %v2174 = vpop.f32.mrb[0].mxu0
        %v2175 = vadd.f32 %v2062, %v2174
        %v2176 = vpop.f32.mrb[0].mxu0
        %v2177 = vadd.f32 %v2064, %v2176
        %v2178 = vpop.f32.mrb[0].mxu0
        %v2179 = vadd.f32 %v2066, %v2178
        %v2180 = vpop.f32.mrb[0].mxu0
        %v2181 = vadd.f32 %v2068, %v2180
        %2182 = vmatprep.mubr.bf16.mxu0 %v1594
        %2183 = vmatmul.mubr.bf16.gmra.mrb[0].mxu0 %v1593
        %v2184 = vpop.f32.mrb[0].mxu0
        %v2185 = vadd.f32 %v2072, %v2184
        %v2186 = vpop.f32.mrb[0].mxu0
        %v2187 = vadd.f32 %v2074, %v2186
        %v2188 = vpop.f32.mrb[0].mxu0
        %v2189 = vadd.f32 %v2076, %v2188
        %v2190 = vpop.f32.mrb[0].mxu0
        %v2191 = vadd.f32 %v2078, %v2190
        %2192 = vmatprep.mubr.bf16.mxu0 %v1598
        %2193 = vmatmul.mubr.bf16.gmra.mrb[0].mxu0 %v1597
        %v2194 = vpop.f32.mrb[0].mxu0
        %v2195 = vadd.f32 %v2082, %v2194
        %v2196 = vpop.f32.mrb[0].mxu0
        %v2197 = vadd.f32 %v2084, %v2196
        %v2198 = vpop.f32.mrb[0].mxu0
        %v2199 = vadd.f32 %v2086, %v2198
        %v2200 = vpop.f32.mrb[0].mxu0
        %v2201 = vadd.f32 %v2088, %v2200
        %2202 = vmatprep.mubr.bf16.mxu0 %v1602
        %2203 = vmatmul.mubr.bf16.gmra.mrb[0].mxu0 %v1601
        %v2204 = vpop.f32.mrb[0].mxu0
        %v2205 = vadd.f32 %v2092, %v2204
        %v2206 = vpop.f32.mrb[0].mxu0
        %v2207 = vadd.f32 %v2094, %v2206
        %v2208 = vpop.f32.mrb[0].mxu0
        %v2209 = vadd.f32 %v2096, %v2208
        %v2210 = vpop.f32.mrb[0].mxu0
        %v2211 = vadd.f32 %v2098, %v2210
        %2212 = vmatprep.mubr.bf16.mxu0 %v1606
        %2213 = vmatmul.mubr.bf16.gmra.mrb[0].mxu0 %v1605
        %v2214 = vpop.f32.mrb[0].mxu0
        %v2215 = vadd.f32 %v2102, %v2214
        %v2216 = vpop.f32.mrb[0].mxu0
        %v2217 = vadd.f32 %v2104, %v2216
        %v2218 = vpop.f32.mrb[0].mxu0
        %v2219 = vadd.f32 %v2106, %v2218
        %v2220 = vpop.f32.mrb[0].mxu0
        %v2221 = vadd.f32 %v2108, %v2220
        %2222 = vmatprep.mubr.bf16.mxu0 %v1610
        %2223 = vmatmul.mubr.bf16.gmra.mrb[0].mxu0 %v1609
        %v2224 = vpop.f32.mrb[0].mxu0
        %v2225 = vadd.f32 %v2112, %v2224
        %v2226 = vpop.f32.mrb[0].mxu0
        %v2227 = vadd.f32 %v2114, %v2226
        %v2228 = vpop.f32.mrb[0].mxu0
        %v2229 = vadd.f32 %v2116, %v2228
        %v2230 = vpop.f32.mrb[0].mxu0
        %v2231 = vadd.f32 %v2118, %v2230
        %2232 = vdwg.mxu0
        %v2233 = vpack.c.bf16 %v2159, %v2155
        %v2234 = vpack.c.bf16 %v2161, %v2157
        %v2235 = vpack.c.bf16 %v2169, %v2165
        %v2236 = vpack.c.bf16 %v2171, %v2167
        %v2237 = vpack.c.bf16 %v2179, %v2175
        %v2238 = vpack.c.bf16 %v2181, %v2177
        %v2239 = vpack.c.bf16 %v2189, %v2185
        %v2240 = vpack.c.bf16 %v2191, %v2187
        %v2241 = vpack.c.bf16 %v2199, %v2195
        %v2242 = vpack.c.bf16 %v2201, %v2197
        %v2243 = vpack.c.bf16 %v2209, %v2205
        %v2244 = vpack.c.bf16 %v2211, %v2207
        %v2245 = vpack.c.bf16 %v2219, %v2215
        %v2246 = vpack.c.bf16 %v2221, %v2217
        %v2247 = vpack.c.bf16 %v2229, %v2225
        %v2248 = vpack.c.bf16 %v2231, %v2227
        %v2265 = vunpack.c.l.b16 %v2233
        %v2266 = vunpack.c.l.b16 %v2234
        %v2267 = vunpack.c.h.b16 %v2233
        %v2268 = vunpack.c.h.b16 %v2234
        %v2269 = vunpack.c.l.b16 %v2235
        %v2270 = vunpack.c.l.b16 %v2236
        %v2271 = vunpack.c.h.b16 %v2235
        %v2272 = vunpack.c.h.b16 %v2236
        %v2273 = vunpack.c.l.b16 %v2237
        %v2274 = vunpack.c.l.b16 %v2238
        %v2275 = vunpack.c.h.b16 %v2237
        %v2276 = vunpack.c.h.b16 %v2238
        %v2277 = vunpack.c.l.b16 %v2239
        %v2278 = vunpack.c.l.b16 %v2240
        %v2279 = vunpack.c.h.b16 %v2239
        %v2280 = vunpack.c.h.b16 %v2240
        %v2281 = vunpack.c.l.b16 %v2241
        %v2282 = vunpack.c.l.b16 %v2242
        %v2283 = vunpack.c.h.b16 %v2241
        %v2284 = vunpack.c.h.b16 %v2242
        %v2285 = vunpack.c.l.b16 %v2243
        %v2286 = vunpack.c.l.b16 %v2244
        %v2287 = vunpack.c.h.b16 %v2243
        %v2288 = vunpack.c.h.b16 %v2244
        %v2289 = vunpack.c.l.b16 %v2245
        %v2290 = vunpack.c.l.b16 %v2246
        %v2291 = vunpack.c.h.b16 %v2245
        %v2292 = vunpack.c.h.b16 %v2246
        %v2293 = vunpack.c.l.b16 %v2247
        %v2294 = vunpack.c.l.b16 %v2248
        %v2295 = vunpack.c.h.b16 %v2247
        %v2296 = vunpack.c.h.b16 %v2248
        %v2297 = vpack.c.b16 %v2266, %v2265
        %v2298 = vpack.c.b16 %v2268, %v2267
        %v2299 = vpack.c.b16 %v2270, %v2269
        %v2300 = vpack.c.b16 %v2272, %v2271
        %v2301 = vpack.c.b16 %v2274, %v2273
        %v2302 = vpack.c.b16 %v2276, %v2275
        %v2303 = vpack.c.b16 %v2278, %v2277
        %v2304 = vpack.c.b16 %v2280, %v2279
        %v2305 = vpack.c.b16 %v2282, %v2281
        %v2306 = vpack.c.b16 %v2284, %v2283
        %v2307 = vpack.c.b16 %v2286, %v2285
        %v2308 = vpack.c.b16 %v2288, %v2287
        %v2309 = vpack.c.b16 %v2290, %v2289
        %v2310 = vpack.c.b16 %v2292, %v2291
        %v2311 = vpack.c.b16 %v2294, %v2293
        %v2312 = vpack.c.b16 %v2296, %v2295
        %2329 = vst [vmem:[%s272] sm:$0xff] %v2297
        %2330 = vst [vmem:[%s272 + $0x8] sm:$0xff] %v2298
        %2331 = vst [vmem:[%s272 + $0x10] sm:$0xff] %v2299
        %2332 = vst [vmem:[%s272 + $0x18] sm:$0xff] %v2300
        %2333 = vst [vmem:[%s272 + $0x20] sm:$0xff] %v2301
        %2334 = vst [vmem:[%s272 + $0x28] sm:$0xff] %v2302
        %2335 = vst [vmem:[%s272 + $0x30] sm:$0xff] %v2303
        %2336 = vst [vmem:[%s272 + $0x38] sm:$0xff] %v2304
        %2337 = vst [vmem:[%s272 + $0x40] sm:$0xff] %v2305
        %2338 = vst [vmem:[%s272 + $0x48] sm:$0xff] %v2306
        %2339 = vst [vmem:[%s272 + $0x50] sm:$0xff] %v2307
        %2340 = vst [vmem:[%s272 + $0x58] sm:$0xff] %v2308
        %2341 = vst [vmem:[%s272 + $0x60] sm:$0xff] %v2309
        %2342 = vst [vmem:[%s272 + $0x68] sm:$0xff] %v2310
        %2343 = vst [vmem:[%s272 + $0x70] sm:$0xff] %v2311
        %2344 = vst [vmem:[%s272 + $0x78] sm:$0xff] %v2312
        %s2345 = sand.u32 %s141, 1
        %s2346 = scalar_lea.sflag [#allocation4], %s2345
        %s2347 = sand.u32 %s141, 1
        %s2348 = smul.addr %s2347, 128
        %s2349 = scalar_lea.vmem [#allocation8], %s2348
        // Predicated region
        $region53: #{_mlp_pallas.1} parent=39 // pred_check
          %p2350 = pneg %p151
        $region54: #{_mlp_pallas.1} parent=39 // pred_check_branch
          %2352 = sbr.rel (%p2350) target = $region56
        $region55: #{_mlp_pallas.1} parent=39 // pred_region
          %s2353 = smul.u32 16, %s23
          %s2355 = ssub.s32 2048, 2048
          %2356 = vsyncadd %s2346, %s2355
          %s2357 = smul.addr %s2353, 2
          %s2358 = smul.addr %s2357, 64
          %s2359 = scalar_lea.hbm %s5, %s2358
          %s2360 = sshll.u32 %s2349, 4
          %s2361 = int_to_ptr.vmem [resolvable:$true] %s2360
          %2366 = dma.vmem_to_hbm [thread:$0]  %s2361, 2048, %s2359, %s2346, 128, 128, 8
        $region56: #{_mlp_pallas.1} parent=39 // pred_fallthru
          _
      $region40: #{_mlp_pallas.1} parent=5 // pred_fallthru
        _
      %p2367 = scmp.le.s32.totalorder 2, %s18
      // Predicated region
      $region57: #{_mlp_pallas.1} parent=5 // pred_check
        %p2368 = pneg %p2367
      $region58: #{_mlp_pallas.1} parent=5 // pred_check_branch
        %2370 = sbr.rel (%p2368) target = $region60
      $region59: #{_mlp_pallas.1} parent=5 // pred_region
        %s2371 = ssub.s32 %s18, 2
        // Predicated region
        $region61: #{_mlp_pallas.1} parent=59 // pred_check
          %p2372 = pneg %p157
        $region62: #{_mlp_pallas.1} parent=59 // pred_check_branch
          %2374 = sbr.rel (%p2372) target = $region64
        $region63: #{_mlp_pallas.1} parent=59 // pred_region
          %s2375 = sand.u32 %s142, 1
          %s2376 = scalar_lea.sflag [#allocation4], %s2375
          %s2377 = sand.u32 %s142, 1
          %s2378 = smul.addr %s2377, 128
          %s2379 = scalar_lea.vmem [#allocation8], %s2378
          %2380 = dma.done %s2376, 2048
        $region64: #{_mlp_pallas.1} parent=59 // pred_fallthru
          _
      $region60: #{_mlp_pallas.1} parent=5 // pred_fallthru
        _
    $region6: #{_mlp_pallas.1} parent=1 // loop_footer
      %s22 = sadd.s32 1, %s18
    $region7: #{_mlp_pallas.1} parent=1 // loop_footer_branch
      %17 = sbr.rel target = $region3
    $region8: #{_mlp_pallas.1} parent=1 // loop_exit
      _
    %2381 = vsyncpa [#allocation3], 1
    %s2382 = scalar_lea.sflag [#allocation3], 1
    %2383 = vsyncpa %s2382, 1
    %2384 = vsyncpa [#allocation6], 1
    %2385 = vsyncpa [#allocation4], 1
    %s2386 = scalar_lea.sflag [#allocation4], 1
    %2387 = vsyncpa %s2386, 1

</llo_original>
